<compile_context>
chip_gen: v5e
topology: v5e:2x2
jax: 0.10.0
libtpu: 0.0.40
codegen_flags: <defaults>
</compile_context>

<pallas_src>
import functools

import jax
import jax.numpy as jnp
from jax.experimental import pallas as pl
from jax.experimental.pallas import tpu as pltpu

LANE = 128
SUB_ALIGN = 16  # sublane alignment that is tile-friendly for both bf16 (16) and f32 (8)


def _round_up(x, m):
    return (x + m - 1) // m * m


def _conv_bn_relu_kernel(x_ref, w_ref, b_ref, o_ref, *, TH, W, Wp, KH, KW,
                         C_in_p, C_out_p):
    # x_ref: (1, 1, TH+KH-1, Wp, C_in_p)  bf16 input strip (with 2 halo rows), one (n, strip)
    # w_ref: (KW, KH*C_in_p, C_out_p)     bf16 conv weight with BN scale folded in
    # b_ref: (1, C_out_p)                 f32 folded BN bias
    # o_ref: (1, TH, W, C_out_p)          output strip
    x = x_ref[0, 0]                                           # (TH+KH-1, Wp, C_in_p)

    # Fold KH into the contraction: kh-shifted views are leading-dim slices (cheap, no
    # sublane realignment); the concat is along the lane axis at 128-channel granularity.
    xcat = jnp.concatenate([x[kh:kh + TH] for kh in range(KH)], axis=-1)
    xcat = xcat.reshape(TH * Wp, KH * C_in_p)                 # tile-aligned (Wp % 16 == 0)

    acc = None
    for kw in range(KW):                                      # KW matmuls, K = KH*C_in_p
        y = jnp.dot(xcat, w_ref[kw], preferred_element_type=jnp.float32)
        y = y.reshape(TH, Wp, C_out_p)[:, kw:kw + W, :]       # undo kw shift on output side
        acc = y if acc is None else acc + y

    y = jnp.maximum(acc + b_ref[0], 0.0)                      # fused BN bias + ReLU epilogue
    o_ref[0] = y.astype(o_ref.dtype)


def conv_bn_relu(x_nchw, weight_oihw, gamma, beta, running_mean, running_var,
                 eps=1e-5, *, block_h=8, compute_dtype=jnp.bfloat16):
    """ConvBNReLU forward (eval-mode BN). x_nchw: (N, Cin, H, W) -> (N, Cout, H, W)."""
    N, C_in, H, W = x_nchw.shape
    C_out, C_in_w, KH, KW = weight_oihw.shape
    assert C_in_w == C_in
    assert KH == 3 and KW == 3, "this kernel instantiates ks=3, stride=1, pad=1"

    C_in_p = _round_up(C_in, LANE)
    C_out_p = _round_up(C_out, LANE)
    TH = min(block_h, H)
    n_strips = pl.cdiv(H, TH)
    H_pad = n_strips * TH
    Wp = _round_up(W + KW - 1, SUB_ALIGN)          # padded width (left halo + right pad)

    # ---- one relayout pass: NCHW -> NHWC, bf16, spatial zero-pad, channel pad ----
    x = jnp.transpose(x_nchw, (0, 2, 3, 1)).astype(compute_dtype)
    x = jnp.pad(x, ((0, 0),
                    (1, 1 + H_pad - H),            # top halo + bottom halo/strip pad
                    (1, Wp - W - 1),               # left halo + right pad to Wp
                    (0, C_in_p - C_in)))           # lane-dense channel pad
    # Overlapping (TH+2)-row strips so the kernel only needs plain Blocked BlockSpecs.
    row_idx = jnp.arange(n_strips)[:, None] * TH + jnp.arange(TH + KH - 1)[None, :]
    x_strips = x[:, row_idx]                       # (N, n_strips, TH+2, Wp, C_in_p)

    # ---- fold eval-mode BN into per-output-channel scale/bias; fold scale into W ----
    scale = gamma / jnp.sqrt(running_var + eps)                       # (C_out,)
    bias = beta - running_mean * scale
    w = weight_oihw.astype(jnp.float32) * scale[:, None, None, None]  # fold scale (f32)
    w = jnp.transpose(w, (2, 3, 1, 0))                                # HWIO
    w = jnp.pad(w, ((0, 0), (0, 0), (0, C_in_p - C_in), (0, C_out_p - C_out)))
    # (KW, KH*C_in_p, C_out_p): contraction rows ordered [kh, ci] to match kernel concat.
    w_cat = jnp.transpose(w, (1, 0, 2, 3)).reshape(KW, KH * C_in_p, C_out_p)
    w_cat = w_cat.astype(compute_dtype)
    bias2d = jnp.pad(bias, (0, C_out_p - C_out)).reshape(1, C_out_p).astype(jnp.float32)

    kernel = functools.partial(_conv_bn_relu_kernel, TH=TH, W=W, Wp=Wp, KH=KH, KW=KW,
                               C_in_p=C_in_p, C_out_p=C_out_p)

    out_itemsize = jnp.dtype(x_nchw.dtype).itemsize
    flops = 2 * N * n_strips * (TH * Wp) * (KH * C_in_p) * C_out_p * KW
    bytes_accessed = int(x_strips.size * x_strips.dtype.itemsize
                         + w_cat.size * w_cat.dtype.itemsize
                         + N * H_pad * W * C_out_p * out_itemsize)

    out = pl.pallas_call(
        kernel,
        out_shape=jax.ShapeDtypeStruct((N, H_pad, W, C_out_p), x_nchw.dtype),
        grid_spec=pltpu.PrefetchScalarGridSpec(
            num_scalar_prefetch=0,
            grid=(N, n_strips),
            in_specs=[
                pl.BlockSpec((1, 1, TH + KH - 1, Wp, C_in_p),
                             lambda n, i: (n, i, 0, 0, 0)),
                pl.BlockSpec((KW, KH * C_in_p, C_out_p), lambda n, i: (0, 0, 0)),
                pl.BlockSpec((1, C_out_p), lambda n, i: (0, 0)),
            ],
            out_specs=pl.BlockSpec((1, TH, W, C_out_p), lambda n, i: (n, i, 0, 0)),
        ),
        compiler_params=pltpu.CompilerParams(
            dimension_semantics=("parallel", "parallel"),
            vmem_limit_bytes=32 * 1024 * 1024,
        ),
        cost_estimate=pl.CostEstimate(flops=flops, transcendentals=0,
                                      bytes_accessed=bytes_accessed),
    )(x_strips, w_cat, bias2d)

    out = out[:, :H, :, :C_out]                    # drop strip/channel padding
    return jnp.transpose(out, (0, 3, 1, 2))        # back to NCHW


def _reference(x_nchw, weight_oihw, gamma, beta, running_mean, running_var, eps=1e-5):
    """Pure-JAX f32 reference (eval-mode BN), NCHW in/out."""
    y = jax.lax.conv_general_dilated(
        x_nchw.astype(jnp.float32), weight_oihw.astype(jnp.float32),
        window_strides=(1, 1), padding=((1, 1), (1, 1)),
        dimension_numbers=("NCHW", "OIHW", "NCHW"))
    scale = (gamma / jnp.sqrt(running_var + eps)).reshape(1, -1, 1, 1)
    bias = (beta - running_mean * gamma / jnp.sqrt(running_var + eps)).reshape(1, -1, 1, 1)
    return jnp.maximum(y * scale + bias, 0.0).astype(x_nchw.dtype)


if __name__ == "__main__":
    key = jax.random.PRNGKey(0)
    k_x, k_w, k_g, k_b, k_m, k_v = jax.random.split(key, 6)

    N, C_in, H, W = 2, 4, 16, 16
    C_out, KS = 8, 3

    x = jax.random.normal(k_x, (N, C_in, H, W), dtype=jnp.float32)
    weight = 0.1 * jax.random.normal(k_w, (C_out, C_in, KS, KS), dtype=jnp.float32)
    gamma = 1.0 + 0.1 * jax.random.normal(k_g, (C_out,), dtype=jnp.float32)
    beta = 0.1 * jax.random.normal(k_b, (C_out,), dtype=jnp.float32)
    running_mean = 0.1 * jax.random.normal(k_m, (C_out,), dtype=jnp.float32)
    running_var = jnp.abs(1.0 + 0.1 * jax.random.normal(k_v, (C_out,), dtype=jnp.float32))

    out = conv_bn_relu(x, weight, gamma, beta, running_mean, running_var)
    out = jax.block_until_ready(out)

    ref = _reference(x, weight, gamma, beta, running_mean, running_var)
    assert out.shape == (N, C_out, H, W), out.shape
    # bf16 MXU inputs with fp32 accumulation -> tolerance loosened vs. pure-f32 reference.
    assert jnp.allclose(out, ref, atol=2e-2, rtol=2e-2), \
        float(jnp.max(jnp.abs(out - ref)))

    print("KERNEL_OK")
</pallas_src>

<mosaic_0001>
module attributes {stable_mosaic.version = 11 : i64} {
  func.func @_conv_bn_relu_kernel(%arg0: i32, %arg1: i32, %arg2: memref<1x1x10x32x128xbf16, #tpu.memory_space<vmem>>, %arg3: memref<3x384x128xbf16, #tpu.memory_space<vmem>>, %arg4: memref<1x128xf32, #tpu.memory_space<vmem>>, %arg5: memref<1x8x16x128xf32, #tpu.memory_space<vmem>>) attributes {dimension_semantics = [#tpu.dimension_semantics<parallel>, #tpu.dimension_semantics<parallel>], iteration_bounds = array<i64: 2, 2>, scalar_prefetch = 0 : i64, scratch_operands = 0 : i64, tpu.core_type = #tpu.core_type<tc>, window_params = [{transform_indices = @transform_0, window_bounds = array<i64: 1, 1, 10, 32, 128>}, {pipeline_mode = #tpu.pipeline_mode<synchronous>, transform_indices = @transform_1, window_bounds = array<i64: 3, 384, 128>}, {pipeline_mode = #tpu.pipeline_mode<synchronous>, transform_indices = @transform_2, window_bounds = array<i64: 1, 128>}, {transform_indices = @transform_3, window_bounds = array<i64: 1, 8, 16, 128>}]} {
    %c0 = arith.constant 0 : index
    %c0_0 = arith.constant 0 : index
    %c0_1 = arith.constant 0 : index
    %c0_2 = arith.constant 0 : index
    %c0_3 = arith.constant 0 : index
    %0 = vector.load %arg2[%c0, %c0_0, %c0_1, %c0_2, %c0_3] : memref<1x1x10x32x128xbf16, #tpu.memory_space<vmem>>, vector<1x1x10x32x128xbf16>
    %1 = vector.shape_cast %0 : vector<1x1x10x32x128xbf16> to vector<10x32x128xbf16>
    %2 = vector.extract_strided_slice %1 {offsets = [0, 0, 0], sizes = [8, 32, 128], strides = [1, 1, 1]} : vector<10x32x128xbf16> to vector<8x32x128xbf16>
    %3 = vector.extract_strided_slice %1 {offsets = [1, 0, 0], sizes = [8, 32, 128], strides = [1, 1, 1]} : vector<10x32x128xbf16> to vector<8x32x128xbf16>
    %4 = vector.extract_strided_slice %1 {offsets = [2, 0, 0], sizes = [8, 32, 128], strides = [1, 1, 1]} : vector<10x32x128xbf16> to vector<8x32x128xbf16>
    %5 = tpu.concatenate %2, %3, %4 in 2 : vector<8x32x128xbf16>, vector<8x32x128xbf16>, vector<8x32x128xbf16> -> vector<8x32x384xbf16>
    %6 = vector.shape_cast %5 : vector<8x32x384xbf16> to vector<256x384xbf16>
    %c0_4 = arith.constant 0 : index
    %c0_5 = arith.constant 0 : index
    %c0_6 = arith.constant 0 : index
    %7 = vector.load %arg3[%c0_4, %c0_5, %c0_6] : memref<3x384x128xbf16, #tpu.memory_space<vmem>>, vector<1x384x128xbf16>
    %8 = vector.shape_cast %7 : vector<1x384x128xbf16> to vector<384x128xbf16>
    %cst = arith.constant dense<0.000000e+00> : vector<256x128xf32>
    %9 = tpu.matmul %6, %8, %cst {dimension_numbers = #tpu.dot_dimension_numbers<[1], [0], [0], [1], [0, 0, 1, 1], [], []>} : vector<256x384xbf16>, vector<384x128xbf16>, vector<256x128xf32> -> vector<256x128xf32>
    %10 = vector.shape_cast %9 : vector<256x128xf32> to vector<8x32x128xf32>
    %11 = vector.extract_strided_slice %10 {offsets = [0, 0, 0], sizes = [8, 16, 128], strides = [1, 1, 1]} : vector<8x32x128xf32> to vector<8x16x128xf32>
    %c1 = arith.constant 1 : index
    %c0_7 = arith.constant 0 : index
    %c0_8 = arith.constant 0 : index
    %12 = vector.load %arg3[%c1, %c0_7, %c0_8] : memref<3x384x128xbf16, #tpu.memory_space<vmem>>, vector<1x384x128xbf16>
    %13 = vector.shape_cast %12 : vector<1x384x128xbf16> to vector<384x128xbf16>
    %cst_9 = arith.constant dense<0.000000e+00> : vector<256x128xf32>
    %14 = tpu.matmul %6, %13, %cst_9 {dimension_numbers = #tpu.dot_dimension_numbers<[1], [0], [0], [1], [0, 0, 1, 1], [], []>} : vector<256x384xbf16>, vector<384x128xbf16>, vector<256x128xf32> -> vector<256x128xf32>
    %15 = vector.shape_cast %14 : vector<256x128xf32> to vector<8x32x128xf32>
    %16 = vector.extract_strided_slice %15 {offsets = [0, 1, 0], sizes = [8, 16, 128], strides = [1, 1, 1]} : vector<8x32x128xf32> to vector<8x16x128xf32>
    %17 = arith.addf %11, %16 : vector<8x16x128xf32>
    %c2 = arith.constant 2 : index
    %c0_10 = arith.constant 0 : index
    %c0_11 = arith.constant 0 : index
    %18 = vector.load %arg3[%c2, %c0_10, %c0_11] : memref<3x384x128xbf16, #tpu.memory_space<vmem>>, vector<1x384x128xbf16>
    %19 = vector.shape_cast %18 : vector<1x384x128xbf16> to vector<384x128xbf16>
    %cst_12 = arith.constant dense<0.000000e+00> : vector<256x128xf32>
    %20 = tpu.matmul %6, %19, %cst_12 {dimension_numbers = #tpu.dot_dimension_numbers<[1], [0], [0], [1], [0, 0, 1, 1], [], []>} : vector<256x384xbf16>, vector<384x128xbf16>, vector<256x128xf32> -> vector<256x128xf32>
    %21 = vector.shape_cast %20 : vector<256x128xf32> to vector<8x32x128xf32>
    %22 = vector.extract_strided_slice %21 {offsets = [0, 2, 0], sizes = [8, 16, 128], strides = [1, 1, 1]} : vector<8x32x128xf32> to vector<8x16x128xf32>
    %23 = arith.addf %17, %22 : vector<8x16x128xf32>
    %c0_13 = arith.constant 0 : index
    %c0_14 = arith.constant 0 : index
    %24 = vector.load %arg4[%c0_13, %c0_14] : memref<1x128xf32, #tpu.memory_space<vmem>>, vector<1x128xf32>
    %25 = vector.shape_cast %24 : vector<1x128xf32> to vector<128xf32>
    %26 = vector.shape_cast %25 : vector<128xf32> to vector<1x1x128xf32>
    %27 = vector.broadcast %26 : vector<1x1x128xf32> to vector<8x16x128xf32>
    %28 = arith.addf %23, %27 : vector<8x16x128xf32>
    %cst_15 = arith.constant 0.000000e+00 : f32
    %29 = vector.broadcast %cst_15 : f32 to vector<8x16x128xf32>
    %30 = arith.maximumf %28, %29 : vector<8x16x128xf32>
    %c0_16 = arith.constant 0 : index
    %c0_17 = arith.constant 0 : index
    %c0_18 = arith.constant 0 : index
    %c0_19 = arith.constant 0 : index
    %31 = vector.load %arg5[%c0_16, %c0_17, %c0_18, %c0_19] : memref<1x8x16x128xf32, #tpu.memory_space<vmem>>, vector<1x8x16x128xf32>
    %32 = vector.shape_cast %31 : vector<1x8x16x128xf32> to vector<8x16x128xf32>
    %33 = vector.shape_cast %30 : vector<8x16x128xf32> to vector<1x8x16x128xf32>
    tpu.vector_store %arg5[%c0_16, %c0_17, %c0_18, %c0_19], %33 {strides = array<i32>} : memref<1x8x16x128xf32, #tpu.memory_space<vmem>>, vector<1x8x16x128xf32>,
    return
  }
  func.func @transform_0(%arg0: i32, %arg1: i32) -> (i32, i32, i32, i32, i32) {
    %c0_i32 = arith.constant 0 : i32
    %c0_i32_0 = arith.constant 0 : i32
    %c0_i32_1 = arith.constant 0 : i32
    %c0_i32_2 = arith.constant 0 : i32
    return %arg0, %arg1, %c0_i32, %c0_i32_0, %c0_i32_1 : i32, i32, i32, i32, i32
  }
  func.func @transform_1(%arg0: i32, %arg1: i32) -> (i32, i32, i32) {
    %c0_i32 = arith.constant 0 : i32
    %c0_i32_0 = arith.constant 0 : i32
    %c0_i32_1 = arith.constant 0 : i32
    %c0_i32_2 = arith.constant 0 : i32
    return %c0_i32, %c0_i32_0, %c0_i32_1 : i32, i32, i32
  }
  func.func @transform_2(%arg0: i32, %arg1: i32) -> (i32, i32) {
    %c0_i32 = arith.constant 0 : i32
    %c0_i32_0 = arith.constant 0 : i32
    %c0_i32_1 = arith.constant 0 : i32
    return %c0_i32, %c0_i32_0 : i32, i32
  }
  func.func @transform_3(%arg0: i32, %arg1: i32) -> (i32, i32, i32, i32) {
    %c0_i32 = arith.constant 0 : i32
    %c0_i32_0 = arith.constant 0 : i32
    %c0_i32_1 = arith.constant 0 : i32
    return %arg0, %arg1, %c0_i32, %c0_i32_0 : i32, i32, i32, i32
  }
}

</mosaic_0001>

<llo_original>
// kernel: tpu_custom_call.1
$region0: #{tpu_custom_call.1}
  #allocation0 [shape = 'u32[]', space=smem, size = 0x4, offset = 0x4, fixed_abs, tag = 'smem constant byte address 0x4 - core index']
  #allocation1 [shape = 'u32[72,128]{1,0:T(1,128)}', space=vmem, size = 0x9000, scoped, tag = 'internal scratch']
  %s0 = inlined_call_operand.hbm [shape: bf16[2,2,10,32,128], index: 0, kind: input, shape index: {}]
  %s1 = inlined_call_operand.hbm [shape: bf16[3,384,128], index: 1, kind: input, shape index: {}]
  %s2 = inlined_call_operand.vmem [shape: f32[1,128], index: 2, kind: input, shape index: {}]
  %s3 = inlined_call_operand.hbm [shape: f32[2,16,16,128], index: 3, kind: output, shape index: {}]
  %s4 = sld [smem:[#allocation0]]
  $region53: #{tpu_custom_call.1} parent=0
    _
  %s6 = ssub.s32 1, %s4
  %s7 = scalar_select 0, %s6, %s4
  $region1: #{tpu_custom_call.1} parent=0
    #allocation2 [shape = 'u8[163840]{0}', space=vmem, size = 0x28000, scoped, tag = 'input window, operand 0']
    #allocation3 [shape = 's32[2]{0}', space=sflag, size = 0x8, scoped, tag = 'scoped memory for tpu_custom_call.1']
    #allocation4 [shape = 's32[2]{0}', space=sflag, size = 0x8, scoped, tag = 'scoped memory for tpu_custom_call.1']
    #allocation5 [shape = 'u8[294912]{0}', space=vmem, size = 0x48000, scoped, tag = 'input window, operand 1, single buffered']
    #allocation6 [shape = 's32[1]{0}', space=sflag, size = 0x4, scoped, tag = 'scoped memory for tpu_custom_call.1']
    #allocation7 [shape = 'u8[131072]{0}', space=vmem, size = 0x20000, scoped, tag = 'output window, operand 0']
    %8 = vsyncpa [#allocation3], 0
    %s9 = scalar_lea.sflag [#allocation3], 1
    %10 = vsyncpa %s9, 0
    %11 = vsyncpa [#allocation6], 0
    %12 = vsyncpa [#allocation4], 0
    %s13 = scalar_lea.sflag [#allocation4], 1
    %14 = vsyncpa %s13, 0
    loop: start=0, step=1, limit=6
    $region2: #{tpu_custom_call.1} parent=1 // loop_pre_header
      _
    $region3: #{tpu_custom_call.1} parent=1 // loop_header
      %s16 = sphi 0, %s20
      %p17 = scmp.ge.s32.totalorder %s16, 6
      %s23 = sphi 0, %s35
      %s24 = sphi 0, %s31
      %s25 = sphi 0, %s23
      %s26 = sphi 0, %s24
      %s27 = sphi 0, %s25
      %s28 = sphi 0, %s26
      %s40 = sphi 0, %s42
      %s43 = sphi 0, %s40
      %s44 = sphi 0, %s43
      %s60 = sphi 0, %s44
      %s64 = sphi 0, %s64
      %s66 = sphi 0, %s64
      %s67 = sphi 0, %s66
      %s81 = sphi 0, %s67
      %s85 = sphi 0, %s85
      %s87 = sphi 0, %s85
      %s88 = sphi 0, %s87
      %s102 = sphi 0, %s88
      %s110 = sphi 0, %s112
      %s113 = sphi 0, %s110
      %s114 = sphi 0, %s113
      %s130 = sphi 0, %s114
    $region4: #{tpu_custom_call.1} parent=1 // loop_header_branch
      %19 = sbr.rel (%p17) target = $region8
    $region5: #{tpu_custom_call.1} parent=1 // loop_body
      %s21 = ssub.s32 %s16, 1
      %s22 = ssub.s32 %s16, 2
      %s29 = sadd.s32 1, %s24
      %p30 = scmp.ge.s32.totalorder %s29, 2
      %s31 = scalar_select %p30, 0, %s29
      %s32 = sadd.s32 1, %s23
      %s33 = scalar_select %p30, %s32, %s23
      %p34 = scmp.ge.s32.totalorder %s33, 2
      %s35 = scalar_select %p34, 0, %s33
      %s36 = ssub.s32 %s23, %s35
      %s37 = ssub.s32 %s24, %s31
      %s38 = sor.u32 %s36, %s37
      %p39 = scmp.eq.s32.totalorder %s38, 0
      %s41 = sadd.s32 %s40, 1
      %s42 = scalar_select %p39, %s40, %s41
      %p45 = pneg %p39
      %p46 = scmp.eq.s32.totalorder %s16, 3
      %p47 = por %p45, %p46
      %p48 = scmp.ne.s32.totalorder %s40, %s43
      %p49 = scmp.eq.s32.totalorder %s16, 0
      %p50 = por %p48, %p49
      %p51 = scmp.ne.s32.totalorder %s40, %s43
      %p52 = scmp.eq.s32.totalorder %s21, 3
      %p53 = por %p51, %p52
      %p54 = scmp.ne.s32.totalorder %s43, %s44
      %p55 = scmp.eq.s32.totalorder %s21, 0
      %p56 = por %p54, %p55
      %p57 = scmp.ne.s32.totalorder %s43, %s44
      %p58 = scmp.eq.s32.totalorder %s22, 3
      %p59 = por %p57, %p58
      %p61 = scmp.ne.s32.totalorder %s44, %s60
      %p62 = scmp.eq.s32.totalorder %s22, 0
      %p63 = por %p61, %p62
      %s65 = sadd.s32 %s64, 1
      %p68 = scmp.eq.s32.totalorder %s16, 3
      %p69 = scmp.ne.s32.totalorder %s64, %s66
      %p70 = scmp.eq.s32.totalorder %s16, 0
      %p71 = por %p69, %p70
      %p72 = scmp.ne.s32.totalorder %s64, %s66
      %p73 = scmp.eq.s32.totalorder %s21, 3
      %p74 = por %p72, %p73
      %p75 = scmp.ne.s32.totalorder %s66, %s67
      %p76 = scmp.eq.s32.totalorder %s21, 0
      %p77 = por %p75, %p76
      %p78 = scmp.ne.s32.totalorder %s66, %s67
      %p79 = scmp.eq.s32.totalorder %s22, 3
      %p80 = por %p78, %p79
      %p82 = scmp.ne.s32.totalorder %s67, %s81
      %p83 = scmp.eq.s32.totalorder %s22, 0
      %p84 = por %p82, %p83
      %s86 = sadd.s32 %s85, 1
      %p89 = scmp.eq.s32.totalorder %s16, 3
      %p90 = scmp.ne.s32.totalorder %s85, %s87
      %p91 = scmp.eq.s32.totalorder %s16, 0
      %p92 = por %p90, %p91
      %p93 = scmp.ne.s32.totalorder %s85, %s87
      %p94 = scmp.eq.s32.totalorder %s21, 3
      %p95 = por %p93, %p94
      %p96 = scmp.ne.s32.totalorder %s87, %s88
      %p97 = scmp.eq.s32.totalorder %s21, 0
      %p98 = por %p96, %p97
      %p99 = scmp.ne.s32.totalorder %s87, %s88
      %p100 = scmp.eq.s32.totalorder %s22, 3
      %p101 = por %p99, %p100
      %p103 = scmp.ne.s32.totalorder %s88, %s102
      %p104 = scmp.eq.s32.totalorder %s22, 0
      %p105 = por %p103, %p104
      %s106 = ssub.s32 %s23, %s35
      %s107 = ssub.s32 %s24, %s31
      %s108 = sor.u32 %s106, %s107
      %p109 = scmp.eq.s32.totalorder %s108, 0
      %s111 = sadd.s32 %s110, 1
      %s112 = scalar_select %p109, %s110, %s111
      %p115 = pneg %p109
      %p116 = scmp.eq.s32.totalorder %s16, 3
      %p117 = por %p115, %p116
      %p118 = scmp.ne.s32.totalorder %s110, %s113
      %p119 = scmp.eq.s32.totalorder %s16, 0
      %p120 = por %p118, %p119
      %p121 = scmp.ne.s32.totalorder %s110, %s113
      %p122 = scmp.eq.s32.totalorder %s21, 3
      %p123 = por %p121, %p122
      %p124 = scmp.ne.s32.totalorder %s113, %s114
      %p125 = scmp.eq.s32.totalorder %s21, 0
      %p126 = por %p124, %p125
      %p127 = scmp.ne.s32.totalorder %s113, %s114
      %p128 = scmp.eq.s32.totalorder %s22, 3
      %p129 = por %p127, %p128
      %p131 = scmp.ne.s32.totalorder %s114, %s130
      %p132 = scmp.eq.s32.totalorder %s22, 0
      %p133 = por %p131, %p132
      %p134 = scmp.le.s32.totalorder 1, %s16
      %p135 = scmp.lt.s32.totalorder %s16, 5
      %p136 = pnand %p134, %p135
      %p137 = pneg %p136
      // Predicated region
      $region9: #{tpu_custom_call.1} parent=5 // pred_check
        _
      $region10: #{tpu_custom_call.1} parent=5 // pred_check_branch
        %139 = sbr.rel (%p136) target = $region12
      $region11: #{tpu_custom_call.1} parent=5 // pred_region
        %s140 = ssub.s32 %s16, 1
        // Predicated region
        $region13: #{tpu_custom_call.1} parent=11 // pred_check
          %p141 = pneg %p77
        $region14: #{tpu_custom_call.1} parent=11 // pred_check_branch
          %143 = sbr.rel (%p141) target = $region16
        $region15: #{tpu_custom_call.1} parent=11 // pred_region
          %145 = vsyncadd [#allocation6], 0
          %s146 = sshll.u32 %s1, 4
          %s147 = int_to_ptr.hbm [resolvable:$true] %s146
          %s148 = sshll.u32 [#allocation5], 4
          %s149 = int_to_ptr.vmem [resolvable:$true] %s148
          %154 = dma.hbm_to_vmem [thread:$0]  %s147, 9216, %s149, [#allocation6], 64, 64, 4
        $region16: #{tpu_custom_call.1} parent=11 // pred_fallthru
          _
        // Predicated region
        $region17: #{tpu_custom_call.1} parent=11 // pred_check
          %p155 = pneg %p98
        $region18: #{tpu_custom_call.1} parent=11 // pred_check_branch
          %157 = sbr.rel (%p155) target = $region20
        $region19: #{tpu_custom_call.1} parent=11 // pred_region
          _
        $region20: #{tpu_custom_call.1} parent=11 // pred_fallthru
          _
      $region12: #{tpu_custom_call.1} parent=5 // pred_fallthru
        _
      %p158 = scmp.lt.s32.totalorder %s16, 4
      // Predicated region
      $region21: #{tpu_custom_call.1} parent=5 // pred_check
        %p159 = pneg %p158
      $region22: #{tpu_custom_call.1} parent=5 // pred_check_branch
        %161 = sbr.rel (%p159) target = $region24
      $region23: #{tpu_custom_call.1} parent=5 // pred_region
        // Predicated region
        $region25: #{tpu_custom_call.1} parent=23 // pred_check
          %p162 = pneg %p50
        $region26: #{tpu_custom_call.1} parent=23 // pred_check_branch
          %164 = sbr.rel (%p162) target = $region28
        $region27: #{tpu_custom_call.1} parent=23 // pred_region
          %s165 = sand.u32 %s40, 1
          %s166 = scalar_lea.sflag [#allocation3], %s165
          %s167 = sand.u32 %s40, 1
          %s168 = smul.addr %s167, 160
          %s169 = scalar_lea.vmem [#allocation2], %s168
          %171 = vsyncadd %s166, 0
          %s172 = smul.addr %s24, 40
          %s173 = smul.addr %s23, 80
          %s174 = sadd.s32 %s172, %s173
          %s175 = smul.addr %s174, 4
          %s176 = scalar_lea.hbm %s0, %s175
          %s177 = sshll.u32 %s176, 4
          %s178 = int_to_ptr.hbm [resolvable:$true] %s177
          %s179 = sshll.u32 %s169, 4
          %s180 = int_to_ptr.vmem [resolvable:$true] %s179
          %185 = dma.hbm_to_vmem [thread:$0]  %s178, 2560, %s180, %s166, 64, 64, 4
        $region28: #{tpu_custom_call.1} parent=23 // pred_fallthru
          _
      $region24: #{tpu_custom_call.1} parent=5 // pred_fallthru
        _
      %p186 = scmp.le.s32.totalorder 1, %s16
      %p187 = scmp.lt.s32.totalorder %s16, 5
      %p188 = pnand %p186, %p187
      %p189 = pneg %p188
      // Predicated region
      $region29: #{tpu_custom_call.1} parent=5 // pred_check
        _
      $region30: #{tpu_custom_call.1} parent=5 // pred_check_branch
        %191 = sbr.rel (%p188) target = $region32
      $region31: #{tpu_custom_call.1} parent=5 // pred_region
        %s192 = ssub.s32 %s16, 1
        %s193 = sand.u32 %s43, 1
        %s194 = scalar_lea.sflag [#allocation3], %s193
        %s195 = sand.u32 %s43, 1
        %s196 = smul.addr %s195, 160
        %s197 = scalar_lea.vmem [#allocation2], %s196
        // Predicated region
        $region33: #{tpu_custom_call.1} parent=31 // pred_check
          %p198 = pneg %p56
        $region34: #{tpu_custom_call.1} parent=31 // pred_check_branch
          %200 = sbr.rel (%p198) target = $region36
        $region35: #{tpu_custom_call.1} parent=31 // pred_region
          %202 = dma.done %s194, 2560
        $region36: #{tpu_custom_call.1} parent=31 // pred_fallthru
          _
        // Predicated region
        $region37: #{tpu_custom_call.1} parent=31 // pred_check
          %p203 = pneg %p77
        $region38: #{tpu_custom_call.1} parent=31 // pred_check_branch
          %205 = sbr.rel (%p203) target = $region40
        $region39: #{tpu_custom_call.1} parent=31 // pred_region
          %207 = dma.done [#allocation6], 9216
        $region40: #{tpu_custom_call.1} parent=31 // pred_fallthru
          _
        %s208 = sand.u32 %s43, 1
        %s209 = scalar_lea.sflag [#allocation3], %s208
        %s210 = sand.u32 %s43, 1
        %s211 = smul.addr %s210, 160
        %s212 = scalar_lea.vmem [#allocation2], %s211
        %p213 = pneg %p56
        %p214 = pneg %p53
        %p215 = pneg %p77
        %p216 = pneg %p74
        %p217 = pneg %p98
        %p218 = pneg %p95
        %p219 = pneg %p126
        %p220 = pneg %p123
        %s221 = sand.u32 %s113, 1
        %s222 = scalar_lea.sflag [#allocation4], %s221
        %s223 = sand.u32 %s113, 1
        %s224 = smul.addr %s223, 128
        %s225 = scalar_lea.vmem [#allocation7], %s224
        %s226 = smul.u32 8, %s26
        %v227 = vld [vmem:[%s197] sm:$0xf]
        %v228 = vld [vmem:[%s197 + $0x4] sm:$0xf]
        %v229 = vld [vmem:[%s197 + $0x8] sm:$0xf]
        %v230 = vld [vmem:[%s197 + $0xc] sm:$0xf]
        %v231 = vld [vmem:[%s197 + $0x10] sm:$0xf]
        %v232 = vld [vmem:[%s197 + $0x14] sm:$0xf]
        %v233 = vld [vmem:[%s197 + $0x18] sm:$0xf]
        %v234 = vld [vmem:[%s197 + $0x1c] sm:$0xf]
        %v235 = vld [vmem:[%s197 + $0x20] sm:$0xf]
        %v236 = vld [vmem:[%s197 + $0x24] sm:$0xf]
        %v237 = vld [vmem:[%s197 + $0x28] sm:$0xf]
        %v238 = vld [vmem:[%s197 + $0x2c] sm:$0xf]
        %v239 = vld [vmem:[%s197 + $0x30] sm:$0xf]
        %v240 = vld [vmem:[%s197 + $0x34] sm:$0xf]
        %v241 = vld [vmem:[%s197 + $0x38] sm:$0xf]
        %v242 = vld [vmem:[%s197 + $0x3c] sm:$0xf]
        %v243 = vld [vmem:[%s197 + $0x40] sm:$0xf]
        %v244 = vld [vmem:[%s197 + $0x44] sm:$0xf]
        %v245 = vld [vmem:[%s197 + $0x48] sm:$0xf]
        %v246 = vld [vmem:[%s197 + $0x4c] sm:$0xf]
        %v247 = vld [vmem:[%s197 + $0x50] sm:$0xf]
        %v248 = vld [vmem:[%s197 + $0x54] sm:$0xf]
        %v249 = vld [vmem:[%s197 + $0x58] sm:$0xf]
        %v250 = vld [vmem:[%s197 + $0x5c] sm:$0xf]
        %v251 = vld [vmem:[%s197 + $0x60] sm:$0xf]
        %v252 = vld [vmem:[%s197 + $0x64] sm:$0xf]
        %v253 = vld [vmem:[%s197 + $0x68] sm:$0xf]
        %v254 = vld [vmem:[%s197 + $0x6c] sm:$0xf]
        %v255 = vld [vmem:[%s197 + $0x70] sm:$0xf]
        %v256 = vld [vmem:[%s197 + $0x74] sm:$0xf]
        %v257 = vld [vmem:[%s197 + $0x78] sm:$0xf]
        %v258 = vld [vmem:[%s197 + $0x7c] sm:$0xf]
        %v259 = vld [vmem:[%s197 + $0x80] sm:$0xf]
        %v260 = vld [vmem:[%s197 + $0x84] sm:$0xf]
        %v261 = vld [vmem:[%s197 + $0x88] sm:$0xf]
        %v262 = vld [vmem:[%s197 + $0x8c] sm:$0xf]
        %v263 = vld [vmem:[%s197 + $0x90] sm:$0xf]
        %v264 = vld [vmem:[%s197 + $0x94] sm:$0xf]
        %v265 = vld [vmem:[%s197 + $0x98] sm:$0xf]
        %v266 = vld [vmem:[%s197 + $0x9c] sm:$0xf]
        %v299 = vunpack.c.l.b16 %v227
        %v300 = vunpack.c.l.b16 %v228
        %v301 = vunpack.c.l.b16 %v229
        %v302 = vunpack.c.l.b16 %v230
        %v303 = vunpack.c.l.b16 %v231
        %v304 = vunpack.c.l.b16 %v232
        %v305 = vunpack.c.l.b16 %v233
        %v306 = vunpack.c.l.b16 %v234
        %v307 = vunpack.c.l.b16 %v235
        %v308 = vunpack.c.l.b16 %v236
        %v309 = vunpack.c.l.b16 %v237
        %v310 = vunpack.c.l.b16 %v238
        %v311 = vunpack.c.l.b16 %v239
        %v312 = vunpack.c.l.b16 %v240
        %v313 = vunpack.c.l.b16 %v241
        %v314 = vunpack.c.l.b16 %v242
        %v315 = vunpack.c.l.b16 %v243
        %v316 = vunpack.c.l.b16 %v244
        %v317 = vunpack.c.l.b16 %v245
        %v318 = vunpack.c.l.b16 %v246
        %v319 = vunpack.c.l.b16 %v247
        %v320 = vunpack.c.l.b16 %v248
        %v321 = vunpack.c.l.b16 %v249
        %v322 = vunpack.c.l.b16 %v250
        %v323 = vunpack.c.l.b16 %v251
        %v324 = vunpack.c.l.b16 %v252
        %v325 = vunpack.c.l.b16 %v253
        %v326 = vunpack.c.l.b16 %v254
        %v327 = vunpack.c.l.b16 %v255
        %v328 = vunpack.c.l.b16 %v256
        %v329 = vunpack.c.l.b16 %v257
        %v330 = vunpack.c.l.b16 %v258
        %v331 = vpack.c.b16 %v300, %v299
        %v332 = vpack.c.b16 %v302, %v301
        %v333 = vpack.c.b16 %v304, %v303
        %v334 = vpack.c.b16 %v306, %v305
        %v335 = vpack.c.b16 %v308, %v307
        %v336 = vpack.c.b16 %v310, %v309
        %v337 = vpack.c.b16 %v312, %v311
        %v338 = vpack.c.b16 %v314, %v313
        %v339 = vpack.c.b16 %v316, %v315
        %v340 = vpack.c.b16 %v318, %v317
        %v341 = vpack.c.b16 %v320, %v319
        %v342 = vpack.c.b16 %v322, %v321
        %v343 = vpack.c.b16 %v324, %v323
        %v344 = vpack.c.b16 %v326, %v325
        %v345 = vpack.c.b16 %v328, %v327
        %v346 = vpack.c.b16 %v330, %v329
        %v367 = vunpack.c.l.b16 %v259
        %v368 = vunpack.c.l.b16 %v260
        %v369 = vunpack.c.l.b16 %v261
        %v370 = vunpack.c.l.b16 %v262
        %v371 = vpack.c.b16 %v368, %v367
        %v372 = vpack.c.b16 %v370, %v369
        %v379 = vunpack.c.l.b16 %v263
        %v380 = vunpack.c.l.b16 %v264
        %v381 = vunpack.c.l.b16 %v265
        %v382 = vunpack.c.l.b16 %v266
        %v383 = vpack.c.b16 %v380, %v379
        %v384 = vpack.c.b16 %v382, %v381
        %v387 = vld [vmem:[#allocation5] sm:$0xf]
        %v388 = vld [vmem:[#allocation5 + $0x4] sm:$0xf]
        %v389 = vld [vmem:[#allocation5 + $0x8] sm:$0xf]
        %v390 = vld [vmem:[#allocation5 + $0xc] sm:$0xf]
        %v391 = vld [vmem:[#allocation5 + $0x10] sm:$0xf]
        %v392 = vld [vmem:[#allocation5 + $0x14] sm:$0xf]
        %v393 = vld [vmem:[#allocation5 + $0x18] sm:$0xf]
        %v394 = vld [vmem:[#allocation5 + $0x1c] sm:$0xf]
        %v395 = vld [vmem:[#allocation5 + $0x20] sm:$0xf]
        %v396 = vld [vmem:[#allocation5 + $0x24] sm:$0xf]
        %v397 = vld [vmem:[#allocation5 + $0x28] sm:$0xf]
        %v398 = vld [vmem:[#allocation5 + $0x2c] sm:$0xf]
        %v399 = vld [vmem:[#allocation5 + $0x30] sm:$0xf]
        %v400 = vld [vmem:[#allocation5 + $0x34] sm:$0xf]
        %v401 = vld [vmem:[#allocation5 + $0x38] sm:$0xf]
        %v402 = vld [vmem:[#allocation5 + $0x3c] sm:$0xf]
        %v403 = vld [vmem:[#allocation5 + $0x40] sm:$0xf]
        %v404 = vld [vmem:[#allocation5 + $0x44] sm:$0xf]
        %v405 = vld [vmem:[#allocation5 + $0x48] sm:$0xf]
        %v406 = vld [vmem:[#allocation5 + $0x4c] sm:$0xf]
        %v407 = vld [vmem:[#allocation5 + $0x50] sm:$0xf]
        %v408 = vld [vmem:[#allocation5 + $0x54] sm:$0xf]
        %v409 = vld [vmem:[#allocation5 + $0x58] sm:$0xf]
        %v410 = vld [vmem:[#allocation5 + $0x5c] sm:$0xf]
        %v411 = vld [vmem:[#allocation5 + $0x60] sm:$0xf]
        %v412 = vld [vmem:[#allocation5 + $0x64] sm:$0xf]
        %v413 = vld [vmem:[#allocation5 + $0x68] sm:$0xf]
        %v414 = vld [vmem:[#allocation5 + $0x6c] sm:$0xf]
        %v415 = vld [vmem:[#allocation5 + $0x70] sm:$0xf]
        %v416 = vld [vmem:[#allocation5 + $0x74] sm:$0xf]
        %v417 = vld [vmem:[#allocation5 + $0x78] sm:$0xf]
        %v418 = vld [vmem:[#allocation5 + $0x7c] sm:$0xf]
        %v419 = vld [vmem:[#allocation5 + $0x80] sm:$0xf]
        %v420 = vld [vmem:[#allocation5 + $0x84] sm:$0xf]
        %v421 = vld [vmem:[#allocation5 + $0x88] sm:$0xf]
        %v422 = vld [vmem:[#allocation5 + $0x8c] sm:$0xf]
        %v423 = vld [vmem:[#allocation5 + $0x90] sm:$0xf]
        %v424 = vld [vmem:[#allocation5 + $0x94] sm:$0xf]
        %v425 = vld [vmem:[#allocation5 + $0x98] sm:$0xf]
        %v426 = vld [vmem:[#allocation5 + $0x9c] sm:$0xf]
        %v427 = vld [vmem:[#allocation5 + $0xa0] sm:$0xf]
        %v428 = vld [vmem:[#allocation5 + $0xa4] sm:$0xf]
        %v429 = vld [vmem:[#allocation5 + $0xa8] sm:$0xf]
        %v430 = vld [vmem:[#allocation5 + $0xac] sm:$0xf]
        %v431 = vld [vmem:[#allocation5 + $0xb0] sm:$0xf]
        %v432 = vld [vmem:[#allocation5 + $0xb4] sm:$0xf]
        %v433 = vld [vmem:[#allocation5 + $0xb8] sm:$0xf]
        %v434 = vld [vmem:[#allocation5 + $0xbc] sm:$0xf]
        %v483 = vunpack.c.l.b16 %v387
        %v484 = vunpack.c.l.b16 %v388
        %v485 = vunpack.c.l.b16 %v389
        %v486 = vunpack.c.l.b16 %v390
        %v487 = vunpack.c.l.b16 %v391
        %v488 = vunpack.c.l.b16 %v392
        %v489 = vunpack.c.l.b16 %v393
        %v490 = vunpack.c.l.b16 %v394
        %v491 = vunpack.c.l.b16 %v395
        %v492 = vunpack.c.l.b16 %v396
        %v493 = vunpack.c.l.b16 %v397
        %v494 = vunpack.c.l.b16 %v398
        %v495 = vunpack.c.l.b16 %v399
        %v496 = vunpack.c.l.b16 %v400
        %v497 = vunpack.c.l.b16 %v401
        %v498 = vunpack.c.l.b16 %v402
        %v499 = vunpack.c.l.b16 %v403
        %v500 = vunpack.c.l.b16 %v404
        %v501 = vunpack.c.l.b16 %v405
        %v502 = vunpack.c.l.b16 %v406
        %v503 = vunpack.c.l.b16 %v407
        %v504 = vunpack.c.l.b16 %v408
        %v505 = vunpack.c.l.b16 %v409
        %v506 = vunpack.c.l.b16 %v410
        %v507 = vunpack.c.l.b16 %v411
        %v508 = vunpack.c.l.b16 %v412
        %v509 = vunpack.c.l.b16 %v413
        %v510 = vunpack.c.l.b16 %v414
        %v511 = vunpack.c.l.b16 %v415
        %v512 = vunpack.c.l.b16 %v416
        %v513 = vunpack.c.l.b16 %v417
        %v514 = vunpack.c.l.b16 %v418
        %v515 = vunpack.c.l.b16 %v419
        %v516 = vunpack.c.l.b16 %v420
        %v517 = vunpack.c.l.b16 %v421
        %v518 = vunpack.c.l.b16 %v422
        %v519 = vunpack.c.l.b16 %v423
        %v520 = vunpack.c.l.b16 %v424
        %v521 = vunpack.c.l.b16 %v425
        %v522 = vunpack.c.l.b16 %v426
        %v523 = vunpack.c.l.b16 %v427
        %v524 = vunpack.c.l.b16 %v428
        %v525 = vunpack.c.l.b16 %v429
        %v526 = vunpack.c.l.b16 %v430
        %v527 = vunpack.c.l.b16 %v431
        %v528 = vunpack.c.l.b16 %v432
        %v529 = vunpack.c.l.b16 %v433
        %v530 = vunpack.c.l.b16 %v434
        %v531 = vpack.c.b16 %v484, %v483
        %v532 = vpack.c.b16 %v486, %v485
        %v533 = vpack.c.b16 %v488, %v487
        %v534 = vpack.c.b16 %v490, %v489
        %v535 = vpack.c.b16 %v492, %v491
        %v536 = vpack.c.b16 %v494, %v493
        %v537 = vpack.c.b16 %v496, %v495
        %v538 = vpack.c.b16 %v498, %v497
        %v539 = vpack.c.b16 %v500, %v499
        %v540 = vpack.c.b16 %v502, %v501
        %v541 = vpack.c.b16 %v504, %v503
        %v542 = vpack.c.b16 %v506, %v505
        %v543 = vpack.c.b16 %v508, %v507
        %v544 = vpack.c.b16 %v510, %v509
        %v545 = vpack.c.b16 %v512, %v511
        %v546 = vpack.c.b16 %v514, %v513
        %v547 = vpack.c.b16 %v516, %v515
        %v548 = vpack.c.b16 %v518, %v517
        %v549 = vpack.c.b16 %v520, %v519
        %v550 = vpack.c.b16 %v522, %v521
        %v551 = vpack.c.b16 %v524, %v523
        %v552 = vpack.c.b16 %v526, %v525
        %v553 = vpack.c.b16 %v528, %v527
        %v554 = vpack.c.b16 %v530, %v529
        %579 = vmatpush.bf16.msra.mxu0 %v538
        %580 = vmatpush.bf16.msra.mxu0 %v537
        %581 = vmatpush.bf16.msra.mxu0 %v536
        %582 = vmatpush.bf16.msra.mxu0 %v535
        %583 = vmatpush.bf16.msra.mxu0 %v534
        %584 = vmatpush.bf16.msra.mxu0 %v533
        %585 = vmatpush.bf16.msra.mxu0 %v532
        %586 = vmatpush.bf16.msra.mxu0 %v531
        %587 = vmatmul.bf16.gmra.mxu0 %v331
        %v588 = vpop.f32.mrf.mxu0
        %v589 = vadd.f32 0.0, %v588
        %v590 = vpop.f32.mrf.mxu0
        %v591 = vadd.f32 0.0, %v590
        %592 = vmatmul.bf16.gmra.mxu0 %v332
        %v593 = vpop.f32.mrf.mxu0
        %v594 = vpop.f32.mrf.mxu0
        %595 = vmatmul.bf16.gmra.mxu0 %v333
        %v596 = vpop.f32.mrf.mxu0
        %v597 = vadd.f32 0.0, %v596
        %v598 = vpop.f32.mrf.mxu0
        %v599 = vadd.f32 0.0, %v598
        %600 = vmatmul.bf16.gmra.mxu0 %v334
        %v601 = vpop.f32.mrf.mxu0
        %v602 = vpop.f32.mrf.mxu0
        %603 = vmatmul.bf16.gmra.mxu0 %v335
        %v604 = vpop.f32.mrf.mxu0
        %v605 = vadd.f32 0.0, %v604
        %v606 = vpop.f32.mrf.mxu0
        %v607 = vadd.f32 0.0, %v606
        %608 = vmatmul.bf16.gmra.mxu0 %v336
        %v609 = vpop.f32.mrf.mxu0
        %v610 = vpop.f32.mrf.mxu0
        %611 = vmatmul.bf16.gmra.mxu0 %v337
        %v612 = vpop.f32.mrf.mxu0
        %v613 = vadd.f32 0.0, %v612
        %v614 = vpop.f32.mrf.mxu0
        %v615 = vadd.f32 0.0, %v614
        %616 = vmatmul.bf16.gmra.mxu0 %v338
        %v617 = vpop.f32.mrf.mxu0
        %v618 = vpop.f32.mrf.mxu0
        %619 = vmatmul.bf16.gmra.mxu0 %v339
        %v620 = vpop.f32.mrf.mxu0
        %v621 = vadd.f32 0.0, %v620
        %v622 = vpop.f32.mrf.mxu0
        %v623 = vadd.f32 0.0, %v622
        %624 = vmatmul.bf16.gmra.mxu0 %v340
        %v625 = vpop.f32.mrf.mxu0
        %v626 = vpop.f32.mrf.mxu0
        %627 = vmatmul.bf16.gmra.mxu0 %v341
        %v628 = vpop.f32.mrf.mxu0
        %v629 = vadd.f32 0.0, %v628
        %v630 = vpop.f32.mrf.mxu0
        %v631 = vadd.f32 0.0, %v630
        %632 = vmatmul.bf16.gmra.mxu0 %v342
        %v633 = vpop.f32.mrf.mxu0
        %v634 = vpop.f32.mrf.mxu0
        %635 = vmatmul.bf16.gmra.mxu0 %v343
        %v636 = vpop.f32.mrf.mxu0
        %v637 = vadd.f32 0.0, %v636
        %v638 = vpop.f32.mrf.mxu0
        %v639 = vadd.f32 0.0, %v638
        %640 = vmatmul.bf16.gmra.mxu0 %v344
        %v641 = vpop.f32.mrf.mxu0
        %v642 = vpop.f32.mrf.mxu0
        %643 = vmatmul.bf16.gmra.mxu0 %v345
        %v644 = vpop.f32.mrf.mxu0
        %v645 = vadd.f32 0.0, %v644
        %v646 = vpop.f32.mrf.mxu0
        %v647 = vadd.f32 0.0, %v646
        %648 = vmatmul.bf16.gmra.mxu0 %v346
        %v649 = vpop.f32.mrf.mxu0
        %v650 = vpop.f32.mrf.mxu0
        %651 = vdwg.mxu0
        %652 = vmatpush.bf16.msra.mxu0 %v546
        %653 = vmatpush.bf16.msra.mxu0 %v545
        %654 = vmatpush.bf16.msra.mxu0 %v544
        %655 = vmatpush.bf16.msra.mxu0 %v543
        %656 = vmatpush.bf16.msra.mxu0 %v542
        %657 = vmatpush.bf16.msra.mxu0 %v541
        %658 = vmatpush.bf16.msra.mxu0 %v540
        %659 = vmatpush.bf16.msra.mxu0 %v539
        %660 = vmatmul.bf16.gmra.mxu0 %v333
        %v661 = vpop.f32.mrf.mxu0
        %v662 = vadd.f32 %v589, %v661
        %v663 = vpop.f32.mrf.mxu0
        %v664 = vadd.f32 %v591, %v663
        %665 = vmatmul.bf16.gmra.mxu0 %v334
        %v666 = vpop.f32.mrf.mxu0
        %v667 = vpop.f32.mrf.mxu0
        %668 = vmatmul.bf16.gmra.mxu0 %v335
        %v669 = vpop.f32.mrf.mxu0
        %v670 = vadd.f32 %v597, %v669
        %v671 = vpop.f32.mrf.mxu0
        %v672 = vadd.f32 %v599, %v671
        %673 = vmatmul.bf16.gmra.mxu0 %v336
        %v674 = vpop.f32.mrf.mxu0
        %v675 = vpop.f32.mrf.mxu0
        %676 = vmatmul.bf16.gmra.mxu0 %v337
        %v677 = vpop.f32.mrf.mxu0
        %v678 = vadd.f32 %v605, %v677
        %v679 = vpop.f32.mrf.mxu0
        %v680 = vadd.f32 %v607, %v679
        %681 = vmatmul.bf16.gmra.mxu0 %v338
        %v682 = vpop.f32.mrf.mxu0
        %v683 = vpop.f32.mrf.mxu0
        %684 = vmatmul.bf16.gmra.mxu0 %v339
        %v685 = vpop.f32.mrf.mxu0
        %v686 = vadd.f32 %v613, %v685
        %v687 = vpop.f32.mrf.mxu0
        %v688 = vadd.f32 %v615, %v687
        %689 = vmatmul.bf16.gmra.mxu0 %v340
        %v690 = vpop.f32.mrf.mxu0
        %v691 = vpop.f32.mrf.mxu0
        %692 = vmatmul.bf16.gmra.mxu0 %v341
        %v693 = vpop.f32.mrf.mxu0
        %v694 = vadd.f32 %v621, %v693
        %v695 = vpop.f32.mrf.mxu0
        %v696 = vadd.f32 %v623, %v695
        %697 = vmatmul.bf16.gmra.mxu0 %v342
        %v698 = vpop.f32.mrf.mxu0
        %v699 = vpop.f32.mrf.mxu0
        %700 = vmatmul.bf16.gmra.mxu0 %v343
        %v701 = vpop.f32.mrf.mxu0
        %v702 = vadd.f32 %v629, %v701
        %v703 = vpop.f32.mrf.mxu0
        %v704 = vadd.f32 %v631, %v703
        %705 = vmatmul.bf16.gmra.mxu0 %v344
        %v706 = vpop.f32.mrf.mxu0
        %v707 = vpop.f32.mrf.mxu0
        %708 = vmatmul.bf16.gmra.mxu0 %v345
        %v709 = vpop.f32.mrf.mxu0
        %v710 = vadd.f32 %v637, %v709
        %v711 = vpop.f32.mrf.mxu0
        %v712 = vadd.f32 %v639, %v711
        %713 = vmatmul.bf16.gmra.mxu0 %v346
        %v714 = vpop.f32.mrf.mxu0
        %v715 = vpop.f32.mrf.mxu0
        %716 = vmatmul.bf16.gmra.mxu0 %v371
        %v717 = vpop.f32.mrf.mxu0
        %v718 = vadd.f32 %v645, %v717
        %v719 = vpop.f32.mrf.mxu0
        %v720 = vadd.f32 %v647, %v719
        %721 = vmatmul.bf16.gmra.mxu0 %v372
        %v722 = vpop.f32.mrf.mxu0
        %v723 = vpop.f32.mrf.mxu0
        %724 = vdwg.mxu0
        %725 = vmatpush.bf16.msra.mxu0 %v554
        %726 = vmatpush.bf16.msra.mxu0 %v553
        %727 = vmatpush.bf16.msra.mxu0 %v552
        %728 = vmatpush.bf16.msra.mxu0 %v551
        %729 = vmatpush.bf16.msra.mxu0 %v550
        %730 = vmatpush.bf16.msra.mxu0 %v549
        %731 = vmatpush.bf16.msra.mxu0 %v548
        %732 = vmatpush.bf16.msra.mxu0 %v547
        %733 = vmatmul.bf16.gmra.mxu0 %v335
        %v734 = vpop.f32.mrf.mxu0
        %v735 = vadd.f32 %v662, %v734
        %v736 = vpop.f32.mrf.mxu0
        %v737 = vadd.f32 %v664, %v736
        %738 = vmatmul.bf16.gmra.mxu0 %v336
        %v739 = vpop.f32.mrf.mxu0
        %v740 = vpop.f32.mrf.mxu0
        %741 = vmatmul.bf16.gmra.mxu0 %v337
        %v742 = vpop.f32.mrf.mxu0
        %v743 = vadd.f32 %v670, %v742
        %v744 = vpop.f32.mrf.mxu0
        %v745 = vadd.f32 %v672, %v744
        %746 = vmatmul.bf16.gmra.mxu0 %v338
        %v747 = vpop.f32.mrf.mxu0
        %v748 = vpop.f32.mrf.mxu0
        %749 = vmatmul.bf16.gmra.mxu0 %v339
        %v750 = vpop.f32.mrf.mxu0
        %v751 = vadd.f32 %v678, %v750
        %v752 = vpop.f32.mrf.mxu0
        %v753 = vadd.f32 %v680, %v752
        %754 = vmatmul.bf16.gmra.mxu0 %v340
        %v755 = vpop.f32.mrf.mxu0
        %v756 = vpop.f32.mrf.mxu0
        %757 = vmatmul.bf16.gmra.mxu0 %v341
        %v758 = vpop.f32.mrf.mxu0
        %v759 = vadd.f32 %v686, %v758
        %v760 = vpop.f32.mrf.mxu0
        %v761 = vadd.f32 %v688, %v760
        %762 = vmatmul.bf16.gmra.mxu0 %v342
        %v763 = vpop.f32.mrf.mxu0
        %v764 = vpop.f32.mrf.mxu0
        %765 = vmatmul.bf16.gmra.mxu0 %v343
        %v766 = vpop.f32.mrf.mxu0
        %v767 = vadd.f32 %v694, %v766
        %v768 = vpop.f32.mrf.mxu0
        %v769 = vadd.f32 %v696, %v768
        %770 = vmatmul.bf16.gmra.mxu0 %v344
        %v771 = vpop.f32.mrf.mxu0
        %v772 = vpop.f32.mrf.mxu0
        %773 = vmatmul.bf16.gmra.mxu0 %v345
        %v774 = vpop.f32.mrf.mxu0
        %v775 = vadd.f32 %v702, %v774
        %v776 = vpop.f32.mrf.mxu0
        %v777 = vadd.f32 %v704, %v776
        %778 = vmatmul.bf16.gmra.mxu0 %v346
        %v779 = vpop.f32.mrf.mxu0
        %v780 = vpop.f32.mrf.mxu0
        %781 = vmatmul.bf16.gmra.mxu0 %v371
        %v782 = vpop.f32.mrf.mxu0
        %v783 = vadd.f32 %v710, %v782
        %v784 = vpop.f32.mrf.mxu0
        %v785 = vadd.f32 %v712, %v784
        %786 = vmatmul.bf16.gmra.mxu0 %v372
        %v787 = vpop.f32.mrf.mxu0
        %v788 = vpop.f32.mrf.mxu0
        %789 = vmatmul.bf16.gmra.mxu0 %v383
        %v790 = vpop.f32.mrf.mxu0
        %v791 = vadd.f32 %v718, %v790
        %v792 = vpop.f32.mrf.mxu0
        %v793 = vadd.f32 %v720, %v792
        %794 = vmatmul.bf16.gmra.mxu0 %v384
        %v795 = vpop.f32.mrf.mxu0
        %v796 = vpop.f32.mrf.mxu0
        %797 = vdwg.mxu0
        %s798 = scalar_lea.vmem [#allocation5], 192
        %v799 = vld [vmem:[%s798] sm:$0xf]
        %v800 = vld [vmem:[%s798 + $0x4] sm:$0xf]
        %v801 = vld [vmem:[%s798 + $0x8] sm:$0xf]
        %v802 = vld [vmem:[%s798 + $0xc] sm:$0xf]
        %v803 = vld [vmem:[%s798 + $0x10] sm:$0xf]
        %v804 = vld [vmem:[%s798 + $0x14] sm:$0xf]
        %v805 = vld [vmem:[%s798 + $0x18] sm:$0xf]
        %v806 = vld [vmem:[%s798 + $0x1c] sm:$0xf]
        %v807 = vld [vmem:[%s798 + $0x20] sm:$0xf]
        %v808 = vld [vmem:[%s798 + $0x24] sm:$0xf]
        %v809 = vld [vmem:[%s798 + $0x28] sm:$0xf]
        %v810 = vld [vmem:[%s798 + $0x2c] sm:$0xf]
        %v811 = vld [vmem:[%s798 + $0x30] sm:$0xf]
        %v812 = vld [vmem:[%s798 + $0x34] sm:$0xf]
        %v813 = vld [vmem:[%s798 + $0x38] sm:$0xf]
        %v814 = vld [vmem:[%s798 + $0x3c] sm:$0xf]
        %v815 = vld [vmem:[%s798 + $0x40] sm:$0xf]
        %v816 = vld [vmem:[%s798 + $0x44] sm:$0xf]
        %v817 = vld [vmem:[%s798 + $0x48] sm:$0xf]
        %v818 = vld [vmem:[%s798 + $0x4c] sm:$0xf]
        %v819 = vld [vmem:[%s798 + $0x50] sm:$0xf]
        %v820 = vld [vmem:[%s798 + $0x54] sm:$0xf]
        %v821 = vld [vmem:[%s798 + $0x58] sm:$0xf]
        %v822 = vld [vmem:[%s798 + $0x5c] sm:$0xf]
        %v823 = vld [vmem:[%s798 + $0x60] sm:$0xf]
        %v824 = vld [vmem:[%s798 + $0x64] sm:$0xf]
        %v825 = vld [vmem:[%s798 + $0x68] sm:$0xf]
        %v826 = vld [vmem:[%s798 + $0x6c] sm:$0xf]
        %v827 = vld [vmem:[%s798 + $0x70] sm:$0xf]
        %v828 = vld [vmem:[%s798 + $0x74] sm:$0xf]
        %v829 = vld [vmem:[%s798 + $0x78] sm:$0xf]
        %v830 = vld [vmem:[%s798 + $0x7c] sm:$0xf]
        %v831 = vld [vmem:[%s798 + $0x80] sm:$0xf]
        %v832 = vld [vmem:[%s798 + $0x84] sm:$0xf]
        %v833 = vld [vmem:[%s798 + $0x88] sm:$0xf]
        %v834 = vld [vmem:[%s798 + $0x8c] sm:$0xf]
        %v835 = vld [vmem:[%s798 + $0x90] sm:$0xf]
        %v836 = vld [vmem:[%s798 + $0x94] sm:$0xf]
        %v837 = vld [vmem:[%s798 + $0x98] sm:$0xf]
        %v838 = vld [vmem:[%s798 + $0x9c] sm:$0xf]
        %v839 = vld [vmem:[%s798 + $0xa0] sm:$0xf]
        %v840 = vld [vmem:[%s798 + $0xa4] sm:$0xf]
        %v841 = vld [vmem:[%s798 + $0xa8] sm:$0xf]
        %v842 = vld [vmem:[%s798 + $0xac] sm:$0xf]
        %v843 = vld [vmem:[%s798 + $0xb0] sm:$0xf]
        %v844 = vld [vmem:[%s798 + $0xb4] sm:$0xf]
        %v845 = vld [vmem:[%s798 + $0xb8] sm:$0xf]
        %v846 = vld [vmem:[%s798 + $0xbc] sm:$0xf]
        %v895 = vunpack.c.l.b16 %v799
        %v896 = vunpack.c.l.b16 %v800
        %v897 = vunpack.c.l.b16 %v801
        %v898 = vunpack.c.l.b16 %v802
        %v899 = vunpack.c.l.b16 %v803
        %v900 = vunpack.c.l.b16 %v804
        %v901 = vunpack.c.l.b16 %v805
        %v902 = vunpack.c.l.b16 %v806
        %v903 = vunpack.c.l.b16 %v807
        %v904 = vunpack.c.l.b16 %v808
        %v905 = vunpack.c.l.b16 %v809
        %v906 = vunpack.c.l.b16 %v810
        %v907 = vunpack.c.l.b16 %v811
        %v908 = vunpack.c.l.b16 %v812
        %v909 = vunpack.c.l.b16 %v813
        %v910 = vunpack.c.l.b16 %v814
        %v911 = vunpack.c.l.b16 %v815
        %v912 = vunpack.c.l.b16 %v816
        %v913 = vunpack.c.l.b16 %v817
        %v914 = vunpack.c.l.b16 %v818
        %v915 = vunpack.c.l.b16 %v819
        %v916 = vunpack.c.l.b16 %v820
        %v917 = vunpack.c.l.b16 %v821
        %v918 = vunpack.c.l.b16 %v822
        %v919 = vunpack.c.l.b16 %v823
        %v920 = vunpack.c.l.b16 %v824
        %v921 = vunpack.c.l.b16 %v825
        %v922 = vunpack.c.l.b16 %v826
        %v923 = vunpack.c.l.b16 %v827
        %v924 = vunpack.c.l.b16 %v828
        %v925 = vunpack.c.l.b16 %v829
        %v926 = vunpack.c.l.b16 %v830
        %v927 = vunpack.c.l.b16 %v831
        %v928 = vunpack.c.l.b16 %v832
        %v929 = vunpack.c.l.b16 %v833
        %v930 = vunpack.c.l.b16 %v834
        %v931 = vunpack.c.l.b16 %v835
        %v932 = vunpack.c.l.b16 %v836
        %v933 = vunpack.c.l.b16 %v837
        %v934 = vunpack.c.l.b16 %v838
        %v935 = vunpack.c.l.b16 %v839
        %v936 = vunpack.c.l.b16 %v840
        %v937 = vunpack.c.l.b16 %v841
        %v938 = vunpack.c.l.b16 %v842
        %v939 = vunpack.c.l.b16 %v843
        %v940 = vunpack.c.l.b16 %v844
        %v941 = vunpack.c.l.b16 %v845
        %v942 = vunpack.c.l.b16 %v846
        %v943 = vpack.c.b16 %v896, %v895
        %v944 = vpack.c.b16 %v898, %v897
        %v945 = vpack.c.b16 %v900, %v899
        %v946 = vpack.c.b16 %v902, %v901
        %v947 = vpack.c.b16 %v904, %v903
        %v948 = vpack.c.b16 %v906, %v905
        %v949 = vpack.c.b16 %v908, %v907
        %v950 = vpack.c.b16 %v910, %v909
        %v951 = vpack.c.b16 %v912, %v911
        %v952 = vpack.c.b16 %v914, %v913
        %v953 = vpack.c.b16 %v916, %v915
        %v954 = vpack.c.b16 %v918, %v917
        %v955 = vpack.c.b16 %v920, %v919
        %v956 = vpack.c.b16 %v922, %v921
        %v957 = vpack.c.b16 %v924, %v923
        %v958 = vpack.c.b16 %v926, %v925
        %v959 = vpack.c.b16 %v928, %v927
        %v960 = vpack.c.b16 %v930, %v929
        %v961 = vpack.c.b16 %v932, %v931
        %v962 = vpack.c.b16 %v934, %v933
        %v963 = vpack.c.b16 %v936, %v935
        %v964 = vpack.c.b16 %v938, %v937
        %v965 = vpack.c.b16 %v940, %v939
        %v966 = vpack.c.b16 %v942, %v941
        %991 = vmatpush.bf16.msra.mxu0 %v950
        %992 = vmatpush.bf16.msra.mxu0 %v949
        %993 = vmatpush.bf16.msra.mxu0 %v948
        %994 = vmatpush.bf16.msra.mxu0 %v947
        %995 = vmatpush.bf16.msra.mxu0 %v946
        %996 = vmatpush.bf16.msra.mxu0 %v945
        %997 = vmatpush.bf16.msra.mxu0 %v944
        %998 = vmatpush.bf16.msra.mxu0 %v943
        %999 = vmatmul.bf16.gmra.mxu0 %v331
        %v1000 = vpop.f32.mrf.mxu0
        %v1001 = vadd.f32 0.0, %v1000
        %v1002 = vpop.f32.mrf.mxu0
        %v1003 = vadd.f32 0.0, %v1002
        %1004 = vmatmul.bf16.gmra.mxu0 %v332
        %v1005 = vpop.f32.mrf.mxu0
        %v1006 = vadd.f32 0.0, %v1005
        %v1007 = vpop.f32.mrf.mxu0
        %1008 = vmatmul.bf16.gmra.mxu0 %v333
        %v1009 = vpop.f32.mrf.mxu0
        %v1010 = vadd.f32 0.0, %v1009
        %v1011 = vpop.f32.mrf.mxu0
        %v1012 = vadd.f32 0.0, %v1011
        %1013 = vmatmul.bf16.gmra.mxu0 %v334
        %v1014 = vpop.f32.mrf.mxu0
        %v1015 = vadd.f32 0.0, %v1014
        %v1016 = vpop.f32.mrf.mxu0
        %1017 = vmatmul.bf16.gmra.mxu0 %v335
        %v1018 = vpop.f32.mrf.mxu0
        %v1019 = vadd.f32 0.0, %v1018
        %v1020 = vpop.f32.mrf.mxu0
        %v1021 = vadd.f32 0.0, %v1020
        %1022 = vmatmul.bf16.gmra.mxu0 %v336
        %v1023 = vpop.f32.mrf.mxu0
        %v1024 = vadd.f32 0.0, %v1023
        %v1025 = vpop.f32.mrf.mxu0
        %1026 = vmatmul.bf16.gmra.mxu0 %v337
        %v1027 = vpop.f32.mrf.mxu0
        %v1028 = vadd.f32 0.0, %v1027
        %v1029 = vpop.f32.mrf.mxu0
        %v1030 = vadd.f32 0.0, %v1029
        %1031 = vmatmul.bf16.gmra.mxu0 %v338
        %v1032 = vpop.f32.mrf.mxu0
        %v1033 = vadd.f32 0.0, %v1032
        %v1034 = vpop.f32.mrf.mxu0
        %1035 = vmatmul.bf16.gmra.mxu0 %v339
        %v1036 = vpop.f32.mrf.mxu0
        %v1037 = vadd.f32 0.0, %v1036
        %v1038 = vpop.f32.mrf.mxu0
        %v1039 = vadd.f32 0.0, %v1038
        %1040 = vmatmul.bf16.gmra.mxu0 %v340
        %v1041 = vpop.f32.mrf.mxu0
        %v1042 = vadd.f32 0.0, %v1041
        %v1043 = vpop.f32.mrf.mxu0
        %1044 = vmatmul.bf16.gmra.mxu0 %v341
        %v1045 = vpop.f32.mrf.mxu0
        %v1046 = vadd.f32 0.0, %v1045
        %v1047 = vpop.f32.mrf.mxu0
        %v1048 = vadd.f32 0.0, %v1047
        %1049 = vmatmul.bf16.gmra.mxu0 %v342
        %v1050 = vpop.f32.mrf.mxu0
        %v1051 = vadd.f32 0.0, %v1050
        %v1052 = vpop.f32.mrf.mxu0
        %1053 = vmatmul.bf16.gmra.mxu0 %v343
        %v1054 = vpop.f32.mrf.mxu0
        %v1055 = vadd.f32 0.0, %v1054
        %v1056 = vpop.f32.mrf.mxu0
        %v1057 = vadd.f32 0.0, %v1056
        %1058 = vmatmul.bf16.gmra.mxu0 %v344
        %v1059 = vpop.f32.mrf.mxu0
        %v1060 = vadd.f32 0.0, %v1059
        %v1061 = vpop.f32.mrf.mxu0
        %1062 = vmatmul.bf16.gmra.mxu0 %v345
        %v1063 = vpop.f32.mrf.mxu0
        %v1064 = vadd.f32 0.0, %v1063
        %v1065 = vpop.f32.mrf.mxu0
        %v1066 = vadd.f32 0.0, %v1065
        %1067 = vmatmul.bf16.gmra.mxu0 %v346
        %v1068 = vpop.f32.mrf.mxu0
        %v1069 = vadd.f32 0.0, %v1068
        %v1070 = vpop.f32.mrf.mxu0
        %1071 = vdwg.mxu0
        %1072 = vmatpush.bf16.msra.mxu0 %v958
        %1073 = vmatpush.bf16.msra.mxu0 %v957
        %1074 = vmatpush.bf16.msra.mxu0 %v956
        %1075 = vmatpush.bf16.msra.mxu0 %v955
        %1076 = vmatpush.bf16.msra.mxu0 %v954
        %1077 = vmatpush.bf16.msra.mxu0 %v953
        %1078 = vmatpush.bf16.msra.mxu0 %v952
        %1079 = vmatpush.bf16.msra.mxu0 %v951
        %1080 = vmatmul.bf16.gmra.mxu0 %v333
        %v1081 = vpop.f32.mrf.mxu0
        %v1082 = vadd.f32 %v1001, %v1081
        %v1083 = vpop.f32.mrf.mxu0
        %v1084 = vadd.f32 %v1003, %v1083
        %1085 = vmatmul.bf16.gmra.mxu0 %v334
        %v1086 = vpop.f32.mrf.mxu0
        %v1087 = vadd.f32 %v1006, %v1086
        %v1088 = vpop.f32.mrf.mxu0
        %1089 = vmatmul.bf16.gmra.mxu0 %v335
        %v1090 = vpop.f32.mrf.mxu0
        %v1091 = vadd.f32 %v1010, %v1090
        %v1092 = vpop.f32.mrf.mxu0
        %v1093 = vadd.f32 %v1012, %v1092
        %1094 = vmatmul.bf16.gmra.mxu0 %v336
        %v1095 = vpop.f32.mrf.mxu0
        %v1096 = vadd.f32 %v1015, %v1095
        %v1097 = vpop.f32.mrf.mxu0
        %1098 = vmatmul.bf16.gmra.mxu0 %v337
        %v1099 = vpop.f32.mrf.mxu0
        %v1100 = vadd.f32 %v1019, %v1099
        %v1101 = vpop.f32.mrf.mxu0
        %v1102 = vadd.f32 %v1021, %v1101
        %1103 = vmatmul.bf16.gmra.mxu0 %v338
        %v1104 = vpop.f32.mrf.mxu0
        %v1105 = vadd.f32 %v1024, %v1104
        %v1106 = vpop.f32.mrf.mxu0
        %1107 = vmatmul.bf16.gmra.mxu0 %v339
        %v1108 = vpop.f32.mrf.mxu0
        %v1109 = vadd.f32 %v1028, %v1108
        %v1110 = vpop.f32.mrf.mxu0
        %v1111 = vadd.f32 %v1030, %v1110
        %1112 = vmatmul.bf16.gmra.mxu0 %v340
        %v1113 = vpop.f32.mrf.mxu0
        %v1114 = vadd.f32 %v1033, %v1113
        %v1115 = vpop.f32.mrf.mxu0
        %1116 = vmatmul.bf16.gmra.mxu0 %v341
        %v1117 = vpop.f32.mrf.mxu0
        %v1118 = vadd.f32 %v1037, %v1117
        %v1119 = vpop.f32.mrf.mxu0
        %v1120 = vadd.f32 %v1039, %v1119
        %1121 = vmatmul.bf16.gmra.mxu0 %v342
        %v1122 = vpop.f32.mrf.mxu0
        %v1123 = vadd.f32 %v1042, %v1122
        %v1124 = vpop.f32.mrf.mxu0
        %1125 = vmatmul.bf16.gmra.mxu0 %v343
        %v1126 = vpop.f32.mrf.mxu0
        %v1127 = vadd.f32 %v1046, %v1126
        %v1128 = vpop.f32.mrf.mxu0
        %v1129 = vadd.f32 %v1048, %v1128
        %1130 = vmatmul.bf16.gmra.mxu0 %v344
        %v1131 = vpop.f32.mrf.mxu0
        %v1132 = vadd.f32 %v1051, %v1131
        %v1133 = vpop.f32.mrf.mxu0
        %1134 = vmatmul.bf16.gmra.mxu0 %v345
        %v1135 = vpop.f32.mrf.mxu0
        %v1136 = vadd.f32 %v1055, %v1135
        %v1137 = vpop.f32.mrf.mxu0
        %v1138 = vadd.f32 %v1057, %v1137
        %1139 = vmatmul.bf16.gmra.mxu0 %v346
        %v1140 = vpop.f32.mrf.mxu0
        %v1141 = vadd.f32 %v1060, %v1140
        %v1142 = vpop.f32.mrf.mxu0
        %1143 = vmatmul.bf16.gmra.mxu0 %v371
        %v1144 = vpop.f32.mrf.mxu0
        %v1145 = vadd.f32 %v1064, %v1144
        %v1146 = vpop.f32.mrf.mxu0
        %v1147 = vadd.f32 %v1066, %v1146
        %1148 = vmatmul.bf16.gmra.mxu0 %v372
        %v1149 = vpop.f32.mrf.mxu0
        %v1150 = vadd.f32 %v1069, %v1149
        %v1151 = vpop.f32.mrf.mxu0
        %1152 = vdwg.mxu0
        %1153 = vmatpush.bf16.msra.mxu0 %v966
        %1154 = vmatpush.bf16.msra.mxu0 %v965
        %1155 = vmatpush.bf16.msra.mxu0 %v964
        %1156 = vmatpush.bf16.msra.mxu0 %v963
        %1157 = vmatpush.bf16.msra.mxu0 %v962
        %1158 = vmatpush.bf16.msra.mxu0 %v961
        %1159 = vmatpush.bf16.msra.mxu0 %v960
        %1160 = vmatpush.bf16.msra.mxu0 %v959
        %1161 = vmatmul.bf16.gmra.mxu0 %v335
        %v1162 = vpop.f32.mrf.mxu0
        %v1163 = vadd.f32 %v1082, %v1162
        %v1164 = vpop.f32.mrf.mxu0
        %v1165 = vadd.f32 %v1084, %v1164
        %1166 = vmatmul.bf16.gmra.mxu0 %v336
        %v1167 = vpop.f32.mrf.mxu0
        %v1168 = vadd.f32 %v1087, %v1167
        %v1169 = vpop.f32.mrf.mxu0
        %1170 = vmatmul.bf16.gmra.mxu0 %v337
        %v1171 = vpop.f32.mrf.mxu0
        %v1172 = vadd.f32 %v1091, %v1171
        %v1173 = vpop.f32.mrf.mxu0
        %v1174 = vadd.f32 %v1093, %v1173
        %1175 = vmatmul.bf16.gmra.mxu0 %v338
        %v1176 = vpop.f32.mrf.mxu0
        %v1177 = vadd.f32 %v1096, %v1176
        %v1178 = vpop.f32.mrf.mxu0
        %1179 = vmatmul.bf16.gmra.mxu0 %v339
        %v1180 = vpop.f32.mrf.mxu0
        %v1181 = vadd.f32 %v1100, %v1180
        %v1182 = vpop.f32.mrf.mxu0
        %v1183 = vadd.f32 %v1102, %v1182
        %1184 = vmatmul.bf16.gmra.mxu0 %v340
        %v1185 = vpop.f32.mrf.mxu0
        %v1186 = vadd.f32 %v1105, %v1185
        %v1187 = vpop.f32.mrf.mxu0
        %1188 = vmatmul.bf16.gmra.mxu0 %v341
        %v1189 = vpop.f32.mrf.mxu0
        %v1190 = vadd.f32 %v1109, %v1189
        %v1191 = vpop.f32.mrf.mxu0
        %v1192 = vadd.f32 %v1111, %v1191
        %1193 = vmatmul.bf16.gmra.mxu0 %v342
        %v1194 = vpop.f32.mrf.mxu0
        %v1195 = vadd.f32 %v1114, %v1194
        %v1196 = vpop.f32.mrf.mxu0
        %1197 = vmatmul.bf16.gmra.mxu0 %v343
        %v1198 = vpop.f32.mrf.mxu0
        %v1199 = vadd.f32 %v1118, %v1198
        %v1200 = vpop.f32.mrf.mxu0
        %v1201 = vadd.f32 %v1120, %v1200
        %1202 = vmatmul.bf16.gmra.mxu0 %v344
        %v1203 = vpop.f32.mrf.mxu0
        %v1204 = vadd.f32 %v1123, %v1203
        %v1205 = vpop.f32.mrf.mxu0
        %1206 = vmatmul.bf16.gmra.mxu0 %v345
        %v1207 = vpop.f32.mrf.mxu0
        %v1208 = vadd.f32 %v1127, %v1207
        %v1209 = vpop.f32.mrf.mxu0
        %v1210 = vadd.f32 %v1129, %v1209
        %1211 = vmatmul.bf16.gmra.mxu0 %v346
        %v1212 = vpop.f32.mrf.mxu0
        %v1213 = vadd.f32 %v1132, %v1212
        %v1214 = vpop.f32.mrf.mxu0
        %1215 = vmatmul.bf16.gmra.mxu0 %v371
        %v1216 = vpop.f32.mrf.mxu0
        %v1217 = vadd.f32 %v1136, %v1216
        %v1218 = vpop.f32.mrf.mxu0
        %v1219 = vadd.f32 %v1138, %v1218
        %1220 = vmatmul.bf16.gmra.mxu0 %v372
        %v1221 = vpop.f32.mrf.mxu0
        %v1222 = vadd.f32 %v1141, %v1221
        %v1223 = vpop.f32.mrf.mxu0
        %1224 = vmatmul.bf16.gmra.mxu0 %v383
        %v1225 = vpop.f32.mrf.mxu0
        %v1226 = vadd.f32 %v1145, %v1225
        %v1227 = vpop.f32.mrf.mxu0
        %v1228 = vadd.f32 %v1147, %v1227
        %1229 = vmatmul.bf16.gmra.mxu0 %v384
        %v1230 = vpop.f32.mrf.mxu0
        %v1231 = vadd.f32 %v1150, %v1230
        %v1232 = vpop.f32.mrf.mxu0
        %1233 = vdwg.mxu0
        %vm1258 = vcmask 1046528
        %v1259 = vrot.slane %v1163, 1
        %v1260 = vrot.slane %v1165, 1
        %v1261 = vsel %vm1258, %v1259, %v1260
        %v1262 = vrot.slane %v1168, 1
        %v1263 = vsel %vm1258, %v1260, %v1262
        %v1264 = vrot.slane %v1172, 1
        %v1265 = vrot.slane %v1174, 1
        %v1266 = vsel %vm1258, %v1264, %v1265
        %v1267 = vrot.slane %v1177, 1
        %v1268 = vsel %vm1258, %v1265, %v1267
        %v1269 = vrot.slane %v1181, 1
        %v1270 = vrot.slane %v1183, 1
        %v1271 = vsel %vm1258, %v1269, %v1270
        %v1272 = vrot.slane %v1186, 1
        %v1273 = vsel %vm1258, %v1270, %v1272
        %v1274 = vrot.slane %v1190, 1
        %v1275 = vrot.slane %v1192, 1
        %v1276 = vsel %vm1258, %v1274, %v1275
        %v1277 = vrot.slane %v1195, 1
        %v1278 = vsel %vm1258, %v1275, %v1277
        %v1279 = vrot.slane %v1199, 1
        %v1280 = vrot.slane %v1201, 1
        %v1281 = vsel %vm1258, %v1279, %v1280
        %v1282 = vrot.slane %v1204, 1
        %v1283 = vsel %vm1258, %v1280, %v1282
        %v1284 = vrot.slane %v1208, 1
        %v1285 = vrot.slane %v1210, 1
        %v1286 = vsel %vm1258, %v1284, %v1285
        %v1287 = vrot.slane %v1213, 1
        %v1288 = vsel %vm1258, %v1285, %v1287
        %v1289 = vrot.slane %v1217, 1
        %v1290 = vrot.slane %v1219, 1
        %v1291 = vsel %vm1258, %v1289, %v1290
        %v1292 = vrot.slane %v1222, 1
        %v1293 = vsel %vm1258, %v1290, %v1292
        %v1294 = vrot.slane %v1226, 1
        %v1295 = vrot.slane %v1228, 1
        %v1296 = vsel %vm1258, %v1294, %v1295
        %v1297 = vrot.slane %v1231, 1
        %v1298 = vsel %vm1258, %v1295, %v1297
        %v1315 = vadd.f32 %v735, %v1261
        %v1316 = vadd.f32 %v737, %v1263
        %v1317 = vadd.f32 %v743, %v1266
        %v1318 = vadd.f32 %v745, %v1268
        %v1319 = vadd.f32 %v751, %v1271
        %v1320 = vadd.f32 %v753, %v1273
        %v1321 = vadd.f32 %v759, %v1276
        %v1322 = vadd.f32 %v761, %v1278
        %v1323 = vadd.f32 %v767, %v1281
        %v1324 = vadd.f32 %v769, %v1283
        %v1325 = vadd.f32 %v775, %v1286
        %v1326 = vadd.f32 %v777, %v1288
        %v1327 = vadd.f32 %v783, %v1291
        %v1328 = vadd.f32 %v785, %v1293
        %v1329 = vadd.f32 %v791, %v1296
        %v1330 = vadd.f32 %v793, %v1298
        %s1331 = scalar_lea.vmem [#allocation5], 384
        %v1332 = vld [vmem:[%s1331] sm:$0xf]
        %v1333 = vld [vmem:[%s1331 + $0x4] sm:$0xf]
        %v1334 = vld [vmem:[%s1331 + $0x8] sm:$0xf]
        %v1335 = vld [vmem:[%s1331 + $0xc] sm:$0xf]
        %v1336 = vld [vmem:[%s1331 + $0x10] sm:$0xf]
        %v1337 = vld [vmem:[%s1331 + $0x14] sm:$0xf]
        %v1338 = vld [vmem:[%s1331 + $0x18] sm:$0xf]
        %v1339 = vld [vmem:[%s1331 + $0x1c] sm:$0xf]
        %v1340 = vld [vmem:[%s1331 + $0x20] sm:$0xf]
        %v1341 = vld [vmem:[%s1331 + $0x24] sm:$0xf]
        %v1342 = vld [vmem:[%s1331 + $0x28] sm:$0xf]
        %v1343 = vld [vmem:[%s1331 + $0x2c] sm:$0xf]
        %v1344 = vld [vmem:[%s1331 + $0x30] sm:$0xf]
        %v1345 = vld [vmem:[%s1331 + $0x34] sm:$0xf]
        %v1346 = vld [vmem:[%s1331 + $0x38] sm:$0xf]
        %v1347 = vld [vmem:[%s1331 + $0x3c] sm:$0xf]
        %v1348 = vld [vmem:[%s1331 + $0x40] sm:$0xf]
        %v1349 = vld [vmem:[%s1331 + $0x44] sm:$0xf]
        %v1350 = vld [vmem:[%s1331 + $0x48] sm:$0xf]
        %v1351 = vld [vmem:[%s1331 + $0x4c] sm:$0xf]
        %v1352 = vld [vmem:[%s1331 + $0x50] sm:$0xf]
        %v1353 = vld [vmem:[%s1331 + $0x54] sm:$0xf]
        %v1354 = vld [vmem:[%s1331 + $0x58] sm:$0xf]
        %v1355 = vld [vmem:[%s1331 + $0x5c] sm:$0xf]
        %v1356 = vld [vmem:[%s1331 + $0x60] sm:$0xf]
        %v1357 = vld [vmem:[%s1331 + $0x64] sm:$0xf]
        %v1358 = vld [vmem:[%s1331 + $0x68] sm:$0xf]
        %v1359 = vld [vmem:[%s1331 + $0x6c] sm:$0xf]
        %v1360 = vld [vmem:[%s1331 + $0x70] sm:$0xf]
        %v1361 = vld [vmem:[%s1331 + $0x74] sm:$0xf]
        %v1362 = vld [vmem:[%s1331 + $0x78] sm:$0xf]
        %v1363 = vld [vmem:[%s1331 + $0x7c] sm:$0xf]
        %v1364 = vld [vmem:[%s1331 + $0x80] sm:$0xf]
        %v1365 = vld [vmem:[%s1331 + $0x84] sm:$0xf]
        %v1366 = vld [vmem:[%s1331 + $0x88] sm:$0xf]
        %v1367 = vld [vmem:[%s1331 + $0x8c] sm:$0xf]
        %v1368 = vld [vmem:[%s1331 + $0x90] sm:$0xf]
        %v1369 = vld [vmem:[%s1331 + $0x94] sm:$0xf]
        %v1370 = vld [vmem:[%s1331 + $0x98] sm:$0xf]
        %v1371 = vld [vmem:[%s1331 + $0x9c] sm:$0xf]
        %v1372 = vld [vmem:[%s1331 + $0xa0] sm:$0xf]
        %v1373 = vld [vmem:[%s1331 + $0xa4] sm:$0xf]
        %v1374 = vld [vmem:[%s1331 + $0xa8] sm:$0xf]
        %v1375 = vld [vmem:[%s1331 + $0xac] sm:$0xf]
        %v1376 = vld [vmem:[%s1331 + $0xb0] sm:$0xf]
        %v1377 = vld [vmem:[%s1331 + $0xb4] sm:$0xf]
        %v1378 = vld [vmem:[%s1331 + $0xb8] sm:$0xf]
        %v1379 = vld [vmem:[%s1331 + $0xbc] sm:$0xf]
        %v1428 = vunpack.c.l.b16 %v1332
        %v1429 = vunpack.c.l.b16 %v1333
        %v1430 = vunpack.c.l.b16 %v1334
        %v1431 = vunpack.c.l.b16 %v1335
        %v1432 = vunpack.c.l.b16 %v1336
        %v1433 = vunpack.c.l.b16 %v1337
        %v1434 = vunpack.c.l.b16 %v1338
        %v1435 = vunpack.c.l.b16 %v1339
        %v1436 = vunpack.c.l.b16 %v1340
        %v1437 = vunpack.c.l.b16 %v1341
        %v1438 = vunpack.c.l.b16 %v1342
        %v1439 = vunpack.c.l.b16 %v1343
        %v1440 = vunpack.c.l.b16 %v1344
        %v1441 = vunpack.c.l.b16 %v1345
        %v1442 = vunpack.c.l.b16 %v1346
        %v1443 = vunpack.c.l.b16 %v1347
        %v1444 = vunpack.c.l.b16 %v1348
        %v1445 = vunpack.c.l.b16 %v1349
        %v1446 = vunpack.c.l.b16 %v1350
        %v1447 = vunpack.c.l.b16 %v1351
        %v1448 = vunpack.c.l.b16 %v1352
        %v1449 = vunpack.c.l.b16 %v1353
        %v1450 = vunpack.c.l.b16 %v1354
        %v1451 = vunpack.c.l.b16 %v1355
        %v1452 = vunpack.c.l.b16 %v1356
        %v1453 = vunpack.c.l.b16 %v1357
        %v1454 = vunpack.c.l.b16 %v1358
        %v1455 = vunpack.c.l.b16 %v1359
        %v1456 = vunpack.c.l.b16 %v1360
        %v1457 = vunpack.c.l.b16 %v1361
        %v1458 = vunpack.c.l.b16 %v1362
        %v1459 = vunpack.c.l.b16 %v1363
        %v1460 = vunpack.c.l.b16 %v1364
        %v1461 = vunpack.c.l.b16 %v1365
        %v1462 = vunpack.c.l.b16 %v1366
        %v1463 = vunpack.c.l.b16 %v1367
        %v1464 = vunpack.c.l.b16 %v1368
        %v1465 = vunpack.c.l.b16 %v1369
        %v1466 = vunpack.c.l.b16 %v1370
        %v1467 = vunpack.c.l.b16 %v1371
        %v1468 = vunpack.c.l.b16 %v1372
        %v1469 = vunpack.c.l.b16 %v1373
        %v1470 = vunpack.c.l.b16 %v1374
        %v1471 = vunpack.c.l.b16 %v1375
        %v1472 = vunpack.c.l.b16 %v1376
        %v1473 = vunpack.c.l.b16 %v1377
        %v1474 = vunpack.c.l.b16 %v1378
        %v1475 = vunpack.c.l.b16 %v1379
        %v1476 = vpack.c.b16 %v1429, %v1428
        %v1477 = vpack.c.b16 %v1431, %v1430
        %v1478 = vpack.c.b16 %v1433, %v1432
        %v1479 = vpack.c.b16 %v1435, %v1434
        %v1480 = vpack.c.b16 %v1437, %v1436
        %v1481 = vpack.c.b16 %v1439, %v1438
        %v1482 = vpack.c.b16 %v1441, %v1440
        %v1483 = vpack.c.b16 %v1443, %v1442
        %v1484 = vpack.c.b16 %v1445, %v1444
        %v1485 = vpack.c.b16 %v1447, %v1446
        %v1486 = vpack.c.b16 %v1449, %v1448
        %v1487 = vpack.c.b16 %v1451, %v1450
        %v1488 = vpack.c.b16 %v1453, %v1452
        %v1489 = vpack.c.b16 %v1455, %v1454
        %v1490 = vpack.c.b16 %v1457, %v1456
        %v1491 = vpack.c.b16 %v1459, %v1458
        %v1492 = vpack.c.b16 %v1461, %v1460
        %v1493 = vpack.c.b16 %v1463, %v1462
        %v1494 = vpack.c.b16 %v1465, %v1464
        %v1495 = vpack.c.b16 %v1467, %v1466
        %v1496 = vpack.c.b16 %v1469, %v1468
        %v1497 = vpack.c.b16 %v1471, %v1470
        %v1498 = vpack.c.b16 %v1473, %v1472
        %v1499 = vpack.c.b16 %v1475, %v1474
        %1524 = vmatpush.bf16.msra.mxu0 %v1483
        %1525 = vmatpush.bf16.msra.mxu0 %v1482
        %1526 = vmatpush.bf16.msra.mxu0 %v1481
        %1527 = vmatpush.bf16.msra.mxu0 %v1480
        %1528 = vmatpush.bf16.msra.mxu0 %v1479
        %1529 = vmatpush.bf16.msra.mxu0 %v1478
        %1530 = vmatpush.bf16.msra.mxu0 %v1477
        %1531 = vmatpush.bf16.msra.mxu0 %v1476
        %1532 = vmatmul.bf16.gmra.mxu0 %v331
        %v1533 = vpop.f32.mrf.mxu0
        %v1534 = vadd.f32 0.0, %v1533
        %v1535 = vpop.f32.mrf.mxu0
        %v1536 = vadd.f32 0.0, %v1535
        %1537 = vmatmul.bf16.gmra.mxu0 %v332
        %v1538 = vpop.f32.mrf.mxu0
        %v1539 = vadd.f32 0.0, %v1538
        %v1540 = vpop.f32.mrf.mxu0
        %1541 = vmatmul.bf16.gmra.mxu0 %v333
        %v1542 = vpop.f32.mrf.mxu0
        %v1543 = vadd.f32 0.0, %v1542
        %v1544 = vpop.f32.mrf.mxu0
        %v1545 = vadd.f32 0.0, %v1544
        %1546 = vmatmul.bf16.gmra.mxu0 %v334
        %v1547 = vpop.f32.mrf.mxu0
        %v1548 = vadd.f32 0.0, %v1547
        %v1549 = vpop.f32.mrf.mxu0
        %1550 = vmatmul.bf16.gmra.mxu0 %v335
        %v1551 = vpop.f32.mrf.mxu0
        %v1552 = vadd.f32 0.0, %v1551
        %v1553 = vpop.f32.mrf.mxu0
        %v1554 = vadd.f32 0.0, %v1553
        %1555 = vmatmul.bf16.gmra.mxu0 %v336
        %v1556 = vpop.f32.mrf.mxu0
        %v1557 = vadd.f32 0.0, %v1556
        %v1558 = vpop.f32.mrf.mxu0
        %1559 = vmatmul.bf16.gmra.mxu0 %v337
        %v1560 = vpop.f32.mrf.mxu0
        %v1561 = vadd.f32 0.0, %v1560
        %v1562 = vpop.f32.mrf.mxu0
        %v1563 = vadd.f32 0.0, %v1562
        %1564 = vmatmul.bf16.gmra.mxu0 %v338
        %v1565 = vpop.f32.mrf.mxu0
        %v1566 = vadd.f32 0.0, %v1565
        %v1567 = vpop.f32.mrf.mxu0
        %1568 = vmatmul.bf16.gmra.mxu0 %v339
        %v1569 = vpop.f32.mrf.mxu0
        %v1570 = vadd.f32 0.0, %v1569
        %v1571 = vpop.f32.mrf.mxu0
        %v1572 = vadd.f32 0.0, %v1571
        %1573 = vmatmul.bf16.gmra.mxu0 %v340
        %v1574 = vpop.f32.mrf.mxu0
        %v1575 = vadd.f32 0.0, %v1574
        %v1576 = vpop.f32.mrf.mxu0
        %1577 = vmatmul.bf16.gmra.mxu0 %v341
        %v1578 = vpop.f32.mrf.mxu0
        %v1579 = vadd.f32 0.0, %v1578
        %v1580 = vpop.f32.mrf.mxu0
        %v1581 = vadd.f32 0.0, %v1580
        %1582 = vmatmul.bf16.gmra.mxu0 %v342
        %v1583 = vpop.f32.mrf.mxu0
        %v1584 = vadd.f32 0.0, %v1583
        %v1585 = vpop.f32.mrf.mxu0
        %1586 = vmatmul.bf16.gmra.mxu0 %v343
        %v1587 = vpop.f32.mrf.mxu0
        %v1588 = vadd.f32 0.0, %v1587
        %v1589 = vpop.f32.mrf.mxu0
        %v1590 = vadd.f32 0.0, %v1589
        %1591 = vmatmul.bf16.gmra.mxu0 %v344
        %v1592 = vpop.f32.mrf.mxu0
        %v1593 = vadd.f32 0.0, %v1592
        %v1594 = vpop.f32.mrf.mxu0
        %1595 = vmatmul.bf16.gmra.mxu0 %v345
        %v1596 = vpop.f32.mrf.mxu0
        %v1597 = vadd.f32 0.0, %v1596
        %v1598 = vpop.f32.mrf.mxu0
        %v1599 = vadd.f32 0.0, %v1598
        %1600 = vmatmul.bf16.gmra.mxu0 %v346
        %v1601 = vpop.f32.mrf.mxu0
        %v1602 = vadd.f32 0.0, %v1601
        %v1603 = vpop.f32.mrf.mxu0
        %1604 = vdwg.mxu0
        %1605 = vmatpush.bf16.msra.mxu0 %v1491
        %1606 = vmatpush.bf16.msra.mxu0 %v1490
        %1607 = vmatpush.bf16.msra.mxu0 %v1489
        %1608 = vmatpush.bf16.msra.mxu0 %v1488
        %1609 = vmatpush.bf16.msra.mxu0 %v1487
        %1610 = vmatpush.bf16.msra.mxu0 %v1486
        %1611 = vmatpush.bf16.msra.mxu0 %v1485
        %1612 = vmatpush.bf16.msra.mxu0 %v1484
        %1613 = vmatmul.bf16.gmra.mxu0 %v333
        %v1614 = vpop.f32.mrf.mxu0
        %v1615 = vadd.f32 %v1534, %v1614
        %v1616 = vpop.f32.mrf.mxu0
        %v1617 = vadd.f32 %v1536, %v1616
        %1618 = vmatmul.bf16.gmra.mxu0 %v334
        %v1619 = vpop.f32.mrf.mxu0
        %v1620 = vadd.f32 %v1539, %v1619
        %v1621 = vpop.f32.mrf.mxu0
        %1622 = vmatmul.bf16.gmra.mxu0 %v335
        %v1623 = vpop.f32.mrf.mxu0
        %v1624 = vadd.f32 %v1543, %v1623
        %v1625 = vpop.f32.mrf.mxu0
        %v1626 = vadd.f32 %v1545, %v1625
        %1627 = vmatmul.bf16.gmra.mxu0 %v336
        %v1628 = vpop.f32.mrf.mxu0
        %v1629 = vadd.f32 %v1548, %v1628
        %v1630 = vpop.f32.mrf.mxu0
        %1631 = vmatmul.bf16.gmra.mxu0 %v337
        %v1632 = vpop.f32.mrf.mxu0
        %v1633 = vadd.f32 %v1552, %v1632
        %v1634 = vpop.f32.mrf.mxu0
        %v1635 = vadd.f32 %v1554, %v1634
        %1636 = vmatmul.bf16.gmra.mxu0 %v338
        %v1637 = vpop.f32.mrf.mxu0
        %v1638 = vadd.f32 %v1557, %v1637
        %v1639 = vpop.f32.mrf.mxu0
        %1640 = vmatmul.bf16.gmra.mxu0 %v339
        %v1641 = vpop.f32.mrf.mxu0
        %v1642 = vadd.f32 %v1561, %v1641
        %v1643 = vpop.f32.mrf.mxu0
        %v1644 = vadd.f32 %v1563, %v1643
        %1645 = vmatmul.bf16.gmra.mxu0 %v340
        %v1646 = vpop.f32.mrf.mxu0
        %v1647 = vadd.f32 %v1566, %v1646
        %v1648 = vpop.f32.mrf.mxu0
        %1649 = vmatmul.bf16.gmra.mxu0 %v341
        %v1650 = vpop.f32.mrf.mxu0
        %v1651 = vadd.f32 %v1570, %v1650
        %v1652 = vpop.f32.mrf.mxu0
        %v1653 = vadd.f32 %v1572, %v1652
        %1654 = vmatmul.bf16.gmra.mxu0 %v342
        %v1655 = vpop.f32.mrf.mxu0
        %v1656 = vadd.f32 %v1575, %v1655
        %v1657 = vpop.f32.mrf.mxu0
        %1658 = vmatmul.bf16.gmra.mxu0 %v343
        %v1659 = vpop.f32.mrf.mxu0
        %v1660 = vadd.f32 %v1579, %v1659
        %v1661 = vpop.f32.mrf.mxu0
        %v1662 = vadd.f32 %v1581, %v1661
        %1663 = vmatmul.bf16.gmra.mxu0 %v344
        %v1664 = vpop.f32.mrf.mxu0
        %v1665 = vadd.f32 %v1584, %v1664
        %v1666 = vpop.f32.mrf.mxu0
        %1667 = vmatmul.bf16.gmra.mxu0 %v345
        %v1668 = vpop.f32.mrf.mxu0
        %v1669 = vadd.f32 %v1588, %v1668
        %v1670 = vpop.f32.mrf.mxu0
        %v1671 = vadd.f32 %v1590, %v1670
        %1672 = vmatmul.bf16.gmra.mxu0 %v346
        %v1673 = vpop.f32.mrf.mxu0
        %v1674 = vadd.f32 %v1593, %v1673
        %v1675 = vpop.f32.mrf.mxu0
        %1676 = vmatmul.bf16.gmra.mxu0 %v371
        %v1677 = vpop.f32.mrf.mxu0
        %v1678 = vadd.f32 %v1597, %v1677
        %v1679 = vpop.f32.mrf.mxu0
        %v1680 = vadd.f32 %v1599, %v1679
        %1681 = vmatmul.bf16.gmra.mxu0 %v372
        %v1682 = vpop.f32.mrf.mxu0
        %v1683 = vadd.f32 %v1602, %v1682
        %v1684 = vpop.f32.mrf.mxu0
        %1685 = vdwg.mxu0
        %1686 = vmatpush.bf16.msra.mxu0 %v1499
        %1687 = vmatpush.bf16.msra.mxu0 %v1498
        %1688 = vmatpush.bf16.msra.mxu0 %v1497
        %1689 = vmatpush.bf16.msra.mxu0 %v1496
        %1690 = vmatpush.bf16.msra.mxu0 %v1495
        %1691 = vmatpush.bf16.msra.mxu0 %v1494
        %1692 = vmatpush.bf16.msra.mxu0 %v1493
        %1693 = vmatpush.bf16.msra.mxu0 %v1492
        %1694 = vmatmul.bf16.gmra.mxu0 %v335
        %v1695 = vpop.f32.mrf.mxu0
        %v1696 = vadd.f32 %v1615, %v1695
        %v1697 = vpop.f32.mrf.mxu0
        %v1698 = vadd.f32 %v1617, %v1697
        %1699 = vmatmul.bf16.gmra.mxu0 %v336
        %v1700 = vpop.f32.mrf.mxu0
        %v1701 = vadd.f32 %v1620, %v1700
        %v1702 = vpop.f32.mrf.mxu0
        %1703 = vmatmul.bf16.gmra.mxu0 %v337
        %v1704 = vpop.f32.mrf.mxu0
        %v1705 = vadd.f32 %v1624, %v1704
        %v1706 = vpop.f32.mrf.mxu0
        %v1707 = vadd.f32 %v1626, %v1706
        %1708 = vmatmul.bf16.gmra.mxu0 %v338
        %v1709 = vpop.f32.mrf.mxu0
        %v1710 = vadd.f32 %v1629, %v1709
        %v1711 = vpop.f32.mrf.mxu0
        %1712 = vmatmul.bf16.gmra.mxu0 %v339
        %v1713 = vpop.f32.mrf.mxu0
        %v1714 = vadd.f32 %v1633, %v1713
        %v1715 = vpop.f32.mrf.mxu0
        %v1716 = vadd.f32 %v1635, %v1715
        %1717 = vmatmul.bf16.gmra.mxu0 %v340
        %v1718 = vpop.f32.mrf.mxu0
        %v1719 = vadd.f32 %v1638, %v1718
        %v1720 = vpop.f32.mrf.mxu0
        %1721 = vmatmul.bf16.gmra.mxu0 %v341
        %v1722 = vpop.f32.mrf.mxu0
        %v1723 = vadd.f32 %v1642, %v1722
        %v1724 = vpop.f32.mrf.mxu0
        %v1725 = vadd.f32 %v1644, %v1724
        %1726 = vmatmul.bf16.gmra.mxu0 %v342
        %v1727 = vpop.f32.mrf.mxu0
        %v1728 = vadd.f32 %v1647, %v1727
        %v1729 = vpop.f32.mrf.mxu0
        %1730 = vmatmul.bf16.gmra.mxu0 %v343
        %v1731 = vpop.f32.mrf.mxu0
        %v1732 = vadd.f32 %v1651, %v1731
        %v1733 = vpop.f32.mrf.mxu0
        %v1734 = vadd.f32 %v1653, %v1733
        %1735 = vmatmul.bf16.gmra.mxu0 %v344
        %v1736 = vpop.f32.mrf.mxu0
        %v1737 = vadd.f32 %v1656, %v1736
        %v1738 = vpop.f32.mrf.mxu0
        %1739 = vmatmul.bf16.gmra.mxu0 %v345
        %v1740 = vpop.f32.mrf.mxu0
        %v1741 = vadd.f32 %v1660, %v1740
        %v1742 = vpop.f32.mrf.mxu0
        %v1743 = vadd.f32 %v1662, %v1742
        %1744 = vmatmul.bf16.gmra.mxu0 %v346
        %v1745 = vpop.f32.mrf.mxu0
        %v1746 = vadd.f32 %v1665, %v1745
        %v1747 = vpop.f32.mrf.mxu0
        %1748 = vmatmul.bf16.gmra.mxu0 %v371
        %v1749 = vpop.f32.mrf.mxu0
        %v1750 = vadd.f32 %v1669, %v1749
        %v1751 = vpop.f32.mrf.mxu0
        %v1752 = vadd.f32 %v1671, %v1751
        %1753 = vmatmul.bf16.gmra.mxu0 %v372
        %v1754 = vpop.f32.mrf.mxu0
        %v1755 = vadd.f32 %v1674, %v1754
        %v1756 = vpop.f32.mrf.mxu0
        %1757 = vmatmul.bf16.gmra.mxu0 %v383
        %v1758 = vpop.f32.mrf.mxu0
        %v1759 = vadd.f32 %v1678, %v1758
        %v1760 = vpop.f32.mrf.mxu0
        %v1761 = vadd.f32 %v1680, %v1760
        %1762 = vmatmul.bf16.gmra.mxu0 %v384
        %v1763 = vpop.f32.mrf.mxu0
        %v1764 = vadd.f32 %v1683, %v1763
        %v1765 = vpop.f32.mrf.mxu0
        %1766 = vdwg.mxu0
        %vm1791 = vcmask 1045504
        %v1792 = vrot.slane %v1696, 2
        %v1793 = vrot.slane %v1698, 2
        %v1794 = vsel %vm1791, %v1792, %v1793
        %v1795 = vrot.slane %v1701, 2
        %v1796 = vsel %vm1791, %v1793, %v1795
        %v1797 = vrot.slane %v1705, 2
        %v1798 = vrot.slane %v1707, 2
        %v1799 = vsel %vm1791, %v1797, %v1798
        %v1800 = vrot.slane %v1710, 2
        %v1801 = vsel %vm1791, %v1798, %v1800
        %v1802 = vrot.slane %v1714, 2
        %v1803 = vrot.slane %v1716, 2
        %v1804 = vsel %vm1791, %v1802, %v1803
        %v1805 = vrot.slane %v1719, 2
        %v1806 = vsel %vm1791, %v1803, %v1805
        %v1807 = vrot.slane %v1723, 2
        %v1808 = vrot.slane %v1725, 2
        %v1809 = vsel %vm1791, %v1807, %v1808
        %v1810 = vrot.slane %v1728, 2
        %v1811 = vsel %vm1791, %v1808, %v1810
        %v1812 = vrot.slane %v1732, 2
        %v1813 = vrot.slane %v1734, 2
        %v1814 = vsel %vm1791, %v1812, %v1813
        %v1815 = vrot.slane %v1737, 2
        %v1816 = vsel %vm1791, %v1813, %v1815
        %v1817 = vrot.slane %v1741, 2
        %v1818 = vrot.slane %v1743, 2
        %v1819 = vsel %vm1791, %v1817, %v1818
        %v1820 = vrot.slane %v1746, 2
        %v1821 = vsel %vm1791, %v1818, %v1820
        %v1822 = vrot.slane %v1750, 2
        %v1823 = vrot.slane %v1752, 2
        %v1824 = vsel %vm1791, %v1822, %v1823
        %v1825 = vrot.slane %v1755, 2
        %v1826 = vsel %vm1791, %v1823, %v1825
        %v1827 = vrot.slane %v1759, 2
        %v1828 = vrot.slane %v1761, 2
        %v1829 = vsel %vm1791, %v1827, %v1828
        %v1830 = vrot.slane %v1764, 2
        %v1831 = vsel %vm1791, %v1828, %v1830
        %v1848 = vadd.f32 %v1315, %v1794
        %v1849 = vadd.f32 %v1316, %v1796
        %v1850 = vadd.f32 %v1317, %v1799
        %v1851 = vadd.f32 %v1318, %v1801
        %v1852 = vadd.f32 %v1319, %v1804
        %v1853 = vadd.f32 %v1320, %v1806
        %v1854 = vadd.f32 %v1321, %v1809
        %v1855 = vadd.f32 %v1322, %v1811
        %v1856 = vadd.f32 %v1323, %v1814
        %v1857 = vadd.f32 %v1324, %v1816
        %v1858 = vadd.f32 %v1325, %v1819
        %v1859 = vadd.f32 %v1326, %v1821
        %v1860 = vadd.f32 %v1327, %v1824
        %v1861 = vadd.f32 %v1328, %v1826
        %v1862 = vadd.f32 %v1329, %v1829
        %v1863 = vadd.f32 %v1330, %v1831
        %v1864 = vld [vmem:[%s2] sm:$0x1]
        %v1866 = vperm.slane %v1864, 0
        %v1868 = vadd.f32 %v1848, %v1866
        %v1869 = vadd.f32 %v1849, %v1866
        %v1870 = vadd.f32 %v1850, %v1866
        %v1871 = vadd.f32 %v1851, %v1866
        %v1872 = vadd.f32 %v1852, %v1866
        %v1873 = vadd.f32 %v1853, %v1866
        %v1874 = vadd.f32 %v1854, %v1866
        %v1875 = vadd.f32 %v1855, %v1866
        %v1876 = vadd.f32 %v1856, %v1866
        %v1877 = vadd.f32 %v1857, %v1866
        %v1878 = vadd.f32 %v1858, %v1866
        %v1879 = vadd.f32 %v1859, %v1866
        %v1880 = vadd.f32 %v1860, %v1866
        %v1881 = vadd.f32 %v1861, %v1866
        %v1882 = vadd.f32 %v1862, %v1866
        %v1883 = vadd.f32 %v1863, %v1866
        %v1884 = vmax.f32 %v1868, 0.0
        %v1885 = vmax.f32 %v1869, 0.0
        %v1886 = vmax.f32 %v1870, 0.0
        %v1887 = vmax.f32 %v1871, 0.0
        %v1888 = vmax.f32 %v1872, 0.0
        %v1889 = vmax.f32 %v1873, 0.0
        %v1890 = vmax.f32 %v1874, 0.0
        %v1891 = vmax.f32 %v1875, 0.0
        %v1892 = vmax.f32 %v1876, 0.0
        %v1893 = vmax.f32 %v1877, 0.0
        %v1894 = vmax.f32 %v1878, 0.0
        %v1895 = vmax.f32 %v1879, 0.0
        %v1896 = vmax.f32 %v1880, 0.0
        %v1897 = vmax.f32 %v1881, 0.0
        %v1898 = vmax.f32 %v1882, 0.0
        %v1899 = vmax.f32 %v1883, 0.0
        %1900 = vst [vmem:[%s225] sm:$0xff] %v1884
        %1901 = vst [vmem:[%s225 + $0x8] sm:$0xff] %v1885
        %1902 = vst [vmem:[%s225 + $0x10] sm:$0xff] %v1886
        %1903 = vst [vmem:[%s225 + $0x18] sm:$0xff] %v1887
        %1904 = vst [vmem:[%s225 + $0x20] sm:$0xff] %v1888
        %1905 = vst [vmem:[%s225 + $0x28] sm:$0xff] %v1889
        %1906 = vst [vmem:[%s225 + $0x30] sm:$0xff] %v1890
        %1907 = vst [vmem:[%s225 + $0x38] sm:$0xff] %v1891
        %1908 = vst [vmem:[%s225 + $0x40] sm:$0xff] %v1892
        %1909 = vst [vmem:[%s225 + $0x48] sm:$0xff] %v1893
        %1910 = vst [vmem:[%s225 + $0x50] sm:$0xff] %v1894
        %1911 = vst [vmem:[%s225 + $0x58] sm:$0xff] %v1895
        %1912 = vst [vmem:[%s225 + $0x60] sm:$0xff] %v1896
        %1913 = vst [vmem:[%s225 + $0x68] sm:$0xff] %v1897
        %1914 = vst [vmem:[%s225 + $0x70] sm:$0xff] %v1898
        %1915 = vst [vmem:[%s225 + $0x78] sm:$0xff] %v1899
        %s1916 = sand.u32 %s113, 1
        %s1917 = scalar_lea.sflag [#allocation4], %s1916
        %s1918 = sand.u32 %s113, 1
        %s1919 = smul.addr %s1918, 128
        %s1920 = scalar_lea.vmem [#allocation7], %s1919
        // Predicated region
        $region41: #{tpu_custom_call.1} parent=31 // pred_check
          %p1921 = pneg %p123
        $region42: #{tpu_custom_call.1} parent=31 // pred_check_branch
          %1923 = sbr.rel (%p1921) target = $region44
        $region43: #{tpu_custom_call.1} parent=31 // pred_region
          %s1924 = smul.u32 8, %s26
          %1926 = vsyncadd %s1917, 0
          %s1927 = smul.addr %s1924, 2
          %s1928 = smul.addr %s25, 32
          %s1929 = sadd.s32 %s1927, %s1928
          %s1930 = smul.addr %s1929, 8
          %s1931 = scalar_lea.hbm %s3, %s1930
          %s1932 = sshll.u32 %s1920, 4
          %s1933 = int_to_ptr.vmem [resolvable:$true] %s1932
          %s1934 = sshll.u32 %s1931, 4
          %s1935 = int_to_ptr.hbm [resolvable:$true] %s1934
          %1940 = dma.vmem_to_hbm [thread:$0]  %s1933, 2048, %s1935, %s1917, 128, 128, 8
        $region44: #{tpu_custom_call.1} parent=31 // pred_fallthru
          _
      $region32: #{tpu_custom_call.1} parent=5 // pred_fallthru
        _
      %p1941 = scmp.le.s32.totalorder 2, %s16
      // Predicated region
      $region45: #{tpu_custom_call.1} parent=5 // pred_check
        %p1942 = pneg %p1941
      $region46: #{tpu_custom_call.1} parent=5 // pred_check_branch
        %1944 = sbr.rel (%p1942) target = $region48
      $region47: #{tpu_custom_call.1} parent=5 // pred_region
        %s1945 = ssub.s32 %s16, 2
        // Predicated region
        $region49: #{tpu_custom_call.1} parent=47 // pred_check
          %p1946 = pneg %p129
        $region50: #{tpu_custom_call.1} parent=47 // pred_check_branch
          %1948 = sbr.rel (%p1946) target = $region52
        $region51: #{tpu_custom_call.1} parent=47 // pred_region
          %s1949 = sand.u32 %s114, 1
          %s1950 = scalar_lea.sflag [#allocation4], %s1949
          %s1951 = sand.u32 %s114, 1
          %s1952 = smul.addr %s1951, 128
          %s1953 = scalar_lea.vmem [#allocation7], %s1952
          %1955 = dma.done %s1950, 2048
        $region52: #{tpu_custom_call.1} parent=47 // pred_fallthru
          _
      $region48: #{tpu_custom_call.1} parent=5 // pred_fallthru
        _
    $region6: #{tpu_custom_call.1} parent=1 // loop_footer
      %s20 = sadd.s32 1, %s16
    $region7: #{tpu_custom_call.1} parent=1 // loop_footer_branch
      %15 = sbr.rel target = $region3
    $region8: #{tpu_custom_call.1} parent=1 // loop_exit
      _
    %1956 = vsyncpa [#allocation3], 1
    %s1957 = scalar_lea.sflag [#allocation3], 1
    %1958 = vsyncpa %s1957, 1
    %1959 = vsyncpa [#allocation6], 1
    %1960 = vsyncpa [#allocation4], 1
    %s1961 = scalar_lea.sflag [#allocation4], 1
    %1962 = vsyncpa %s1961, 1

</llo_original>
